<compile_context>
chip_gen: v5e
topology: v5e:2x2
jax: 0.10.0
libtpu: 0.0.40
codegen_flags: <defaults>
</compile_context>

<pallas_src>
import functools

import jax
import jax.numpy as jnp
import numpy as np
from jax.experimental import pallas as pl
from jax.experimental.pallas import tpu as pltpu


# Total per-step block budget (inputs double-buffered + f32 accumulator).
_VMEM_BLOCK_BUDGET_BYTES = 8 * 1024 * 1024
_MAX_TILE_PIXELS = 128 * 1024          # diminishing returns beyond this width
_XLA_FALLBACK_PIXELS = 1024            # levels smaller than this -> plain XLA


def _pick_hw_tile(hw: int, c: int, logit_itemsize: int, label_itemsize: int) -> int:
    """Pixel-tile width: the full extent (always legal) or a multiple of 128,
    budgeted on total (logits + labels) x2 double-buffer + f32 accumulator."""
    if hw <= 256:
        return hw  # full extent on the last dim is always a legal block shape
    per_px = 2 * (c * logit_itemsize + label_itemsize) + 2 * 4
    t = _VMEM_BLOCK_BUDGET_BYTES // per_px
    t = min(t, hw, _MAX_TILE_PIXELS)
    t = max(128, (t // 128) * 128)       # lane-aligned
    return t


def _ce_sum_kernel(logits_ref, labels_ref, out_ref, *, c, hw, thw, n_t, n_inner, ragged):
    """Accumulate per-lane cross-entropy sums for one (batch, half, pixel-tile) block.

    logits_ref: (1, C, THW)   float  -- classes on sublanes, pixels on lanes
    labels_ref: (1, 1, THW)   integer (native dtype, upcast in-register)
    out_ref:    (1, 1, 1, THW) float32 accumulator (same block across the tile axis)
    """
    si = pl.program_id(1)
    ti = pl.program_id(2)

    @pl.when(ti == 0)
    def _init():
        out_ref[...] = jnp.zeros_like(out_ref)

    logits = logits_ref[0].astype(jnp.float32)   # (C, THW)
    labels = labels_ref[0].astype(jnp.int32)     # (1, THW)

    # Numerically stable log-sum-exp over the class (sublane) axis.
    m = jnp.max(logits, axis=0, keepdims=True)                                  # (1, THW)
    lse = m + jnp.log(jnp.sum(jnp.exp(logits - m), axis=0, keepdims=True))      # (1, THW)

    # Target-class logit via a small unrolled per-class compare/select
    # (no iota materialization, no extra sublane reduction).
    picked = jnp.where(labels == 0, logits[0:1, :], 0.0)
    for k in range(1, c):
        picked = picked + jnp.where(labels == k, logits[k:k + 1, :], 0.0)

    ce = lse - picked                                                           # (1, THW)

    if not ragged:
        out_ref[...] += ce.reshape(out_ref.shape)
    else:
        gt = si * n_inner + ti   # global pixel-tile index (may exceed n_t-1: phantom)

        @pl.when(gt < n_t - 1)
        def _plain():
            out_ref[...] += ce.reshape(out_ref.shape)

        @pl.when(gt == n_t - 1)  # last real tile: mask the padded tail
        def _tail():
            col = jax.lax.broadcasted_iota(jnp.int32, (1, thw), 1)
            masked = jnp.where((n_t - 1) * thw + col < hw, ce, 0.0)
            out_ref[...] += masked.reshape(out_ref.shape)
        # gt > n_t - 1: phantom tile (odd tile count split over 2 halves) -> no-op


def _cross_entropy_mean_pallas(logits, labels, tile=None):
    """Mean softmax cross-entropy of one deep-supervision level (Pallas kernel).

    logits: (B, C, *spatial) float32/bfloat16, channels-first (as in PyTorch).
    labels: (B, *spatial) integer class map (any int dtype; no host-side cast).
    """
    b, c = int(logits.shape[0]), int(logits.shape[1])
    hw = 1
    for s in logits.shape[2:]:
        hw *= int(s)

    # Free views of the contiguous channels-first layout (no transpose, no astype).
    logits3 = logits.reshape(b, c, hw)
    labels3 = labels.reshape(b, 1, hw)

    thw = tile if tile is not None else _pick_hw_tile(
        hw, c, logits.dtype.itemsize, labels.dtype.itemsize)
    n_t = pl.cdiv(hw, thw)                       # real pixel tiles
    n_split = 2 if n_t >= 2 else 1               # megacore-friendly split of the tile range
    n_inner = pl.cdiv(n_t, n_split)
    ragged = (hw % thw != 0) or (n_split * n_inner != n_t)

    if n_split * n_inner > n_t:
        # Phantom tiles exist: clamp their DMA source to a valid tile; the kernel skips them.
        def _tile_idx(si, ti):
            return jnp.minimum(si * n_inner + ti, n_t - 1)
    else:
        def _tile_idx(si, ti):
            return si * n_inner + ti

    kernel = functools.partial(
        _ce_sum_kernel, c=c, hw=hw, thw=thw, n_t=n_t, n_inner=n_inner, ragged=ragged)

    cost = pl.CostEstimate(
        flops=b * hw * (6 * c + 8),
        transcendentals=b * hw * (c + 1),
        bytes_accessed=(logits3.size * logits3.dtype.itemsize
                        + labels3.size * labels3.dtype.itemsize
                        + b * n_split * thw * 4),
    )

    partial = pl.pallas_call(
        kernel,
        out_shape=jax.ShapeDtypeStruct((b, n_split, 1, thw), jnp.float32),
        grid_spec=pltpu.PrefetchScalarGridSpec(
            num_scalar_prefetch=0,
            grid=(b, n_split, n_inner),
            in_specs=[
                pl.BlockSpec((1, c, thw), lambda bi, si, ti: (bi, 0, _tile_idx(si, ti))),
                pl.BlockSpec((1, 1, thw), lambda bi, si, ti: (bi, 0, _tile_idx(si, ti))),
            ],
            out_specs=pl.BlockSpec((1, 1, 1, thw), lambda bi, si, ti: (bi, si, 0, 0)),
        ),
        compiler_params=pltpu.CompilerParams(
            dimension_semantics=("parallel", "parallel", "arbitrary"),
        ),
        cost_estimate=cost,
    )(logits3, labels3)

    # Tiny epilogue in XLA: collapse lane partials, normalize by pixel count.
    return jnp.sum(partial) / jnp.float32(b * hw)


def _cross_entropy_mean_xla(logits, labels):
    """Plain-XLA path for tiny levels where a pallas_call is pure launch overhead."""
    logp = jax.nn.log_softmax(logits.astype(jnp.float32), axis=1)
    idx = jnp.expand_dims(labels.astype(jnp.int32), axis=1)
    picked = jnp.take_along_axis(logp, idx, axis=1)
    return -jnp.mean(picked)


def _cross_entropy_mean(logits, labels):
    hw = 1
    for s in logits.shape[2:]:
        hw *= int(s)
    if hw < _XLA_FALLBACK_PIXELS:
        return _cross_entropy_mean_xla(logits, labels)
    return _cross_entropy_mean_pallas(logits, labels)


class MultipleOutputLoss2:
    """JAX/Pallas port of the PyTorch MultipleOutputLoss2 module."""

    def __init__(self, deep: int):
        weights = np.array([1.0 / (2.0 ** i) for i in range(deep)])
        weights = weights / weights.sum()
        self.weight_factors = weights

    def __call__(self, x, y):
        assert isinstance(x, (tuple, list)), "x must be either tuple or list"
        assert isinstance(y, (tuple, list)), "y must be either tuple or list"
        weights = self.weight_factors
        total = jnp.float32(weights[0]) * _cross_entropy_mean(x[0], y[0])
        for i in range(1, len(x)):
            if weights[i] != 0:
                total = total + jnp.float32(weights[i]) * _cross_entropy_mean(x[i], y[i])
        return total


if __name__ == "__main__":
    key = jax.random.PRNGKey(0)
    deep = 3
    B, C = 2, 4
    spatial = [64, 32, 16]  # deep-supervision pyramid: big levels -> Pallas, tiny -> XLA

    xs, ys = [], []
    for s in spatial:
        key, k1, k2 = jax.random.split(key, 3)
        xs.append(jax.random.normal(k1, (B, C, s, s), dtype=jnp.float32))
        # Labels stay in whatever integer dtype they arrive in; the smallest
        # level uses int8 to exercise the narrow-label path (no host-side cast).
        ldt = jnp.int8 if s * s < _XLA_FALLBACK_PIXELS else jnp.int32
        ys.append(jax.random.randint(k2, (B, s, s), 0, C, dtype=jnp.int32).astype(ldt))

    loss_mod = MultipleOutputLoss2(deep)
    out = jax.block_until_ready(loss_mod(xs, ys))

    # Pure-JAX reference of the same semantics.
    def ref_ce(logits, labels):
        lg = jnp.moveaxis(logits, 1, -1).astype(jnp.float32)
        logp = jax.nn.log_softmax(lg, axis=-1)
        picked = jnp.take_along_axis(logp, labels[..., None].astype(jnp.int32), axis=-1)[..., 0]
        return -jnp.mean(picked)

    w = loss_mod.weight_factors
    ref = sum(jnp.float32(w[i]) * ref_ce(xs[i], ys[i]) for i in range(deep))
    assert jnp.allclose(out, ref, rtol=1e-5, atol=1e-5), (out, ref)

    # Ragged pixel count (400 px -> tiles of 384): exercises the two-way
    # parallel split plus the pl.when tail mask on the last tile.
    key, k1, k2 = jax.random.split(key, 3)
    x_odd = jax.random.normal(k1, (B, C, 20, 20), dtype=jnp.float32)
    y_odd = jax.random.randint(k2, (B, 20, 20), 0, C, dtype=jnp.int32)
    got_odd = jax.block_until_ready(_cross_entropy_mean_pallas(x_odd, y_odd))
    assert jnp.allclose(got_odd, ref_ce(x_odd, y_odd), rtol=1e-5, atol=1e-5), got_odd

    # bf16 logits path (half the HBM traffic; f32 math in-kernel).
    got_bf16 = jax.block_until_ready(_cross_entropy_mean_pallas(x_odd.astype(jnp.bfloat16), y_odd))
    ref_bf16 = ref_ce(x_odd.astype(jnp.bfloat16), y_odd)
    assert jnp.allclose(got_bf16, ref_bf16, rtol=1e-5, atol=1e-5), (got_bf16, ref_bf16)

    # Odd tile count with a forced small tile (625 px / 128 -> 5 tiles split 3+3):
    # exercises the phantom-tile skip, tail mask, and an odd class count (C=3).
    key, k1, k2 = jax.random.split(key, 3)
    x_ph = jax.random.normal(k1, (B, 3, 25, 25), dtype=jnp.float32)
    y_ph = jax.random.randint(k2, (B, 25, 25), 0, 3, dtype=jnp.int32)
    got_ph = jax.block_until_ready(_cross_entropy_mean_pallas(x_ph, y_ph, tile=128))
    assert jnp.allclose(got_ph, ref_ce(x_ph, y_ph), rtol=1e-5, atol=1e-5), got_ph

    print("KERNEL_OK")
</pallas_src>

<mosaic_0001>
module attributes {stable_mosaic.version = 11 : i64} {
  func.func @_ce_sum_kernel(%arg0: i32, %arg1: i32, %arg2: i32, %arg3: memref<1x4x4096xf32, #tpu.memory_space<vmem>>, %arg4: memref<1x1x4096xi32, #tpu.memory_space<vmem>>, %arg5: memref<1x1x1x4096xf32, #tpu.memory_space<vmem>>) attributes {dimension_semantics = [#tpu.dimension_semantics<parallel>, #tpu.dimension_semantics<parallel>, #tpu.dimension_semantics<arbitrary>], iteration_bounds = array<i64: 2, 1, 1>, scalar_prefetch = 0 : i64, scratch_operands = 0 : i64, tpu.core_type = #tpu.core_type<tc>, window_params = [{transform_indices = @transform_0, window_bounds = array<i64: 1, 4, 4096>}, {transform_indices = @transform_1, window_bounds = array<i64: 1, 1, 4096>}, {transform_indices = @transform_2, window_bounds = array<i64: 1, 1, 1, 4096>}]} {
    %c0_i32 = arith.constant 0 : i32
    %0 = arith.cmpi eq, %arg2, %c0_i32 : i32
    %1 = arith.extui %0 : i1 to i32
    %c0_i32_0 = arith.constant 0 : i32
    %2 = arith.cmpi ne, %1, %c0_i32_0 : i32
    scf.if %2 {
      %cst_20 = arith.constant 0.000000e+00 : f32
      %44 = vector.broadcast %cst_20 : f32 to vector<1x1x1x4096xf32>
      %c0_21 = arith.constant 0 : index
      %c0_22 = arith.constant 0 : index
      %c0_23 = arith.constant 0 : index
      %c0_24 = arith.constant 0 : index
      %45 = vector.load %arg5[%c0_21, %c0_22, %c0_23, %c0_24] : memref<1x1x1x4096xf32, #tpu.memory_space<vmem>>, vector<1x1x1x4096xf32>
      tpu.vector_store %arg5[%c0_21, %c0_22, %c0_23, %c0_24], %44 {strides = array<i32>} : memref<1x1x1x4096xf32, #tpu.memory_space<vmem>>, vector<1x1x1x4096xf32>,
    } else {
    }
    %c0 = arith.constant 0 : index
    %c0_1 = arith.constant 0 : index
    %c0_2 = arith.constant 0 : index
    %3 = vector.load %arg3[%c0, %c0_1, %c0_2] : memref<1x4x4096xf32, #tpu.memory_space<vmem>>, vector<1x4x4096xf32>
    %4 = vector.shape_cast %3 : vector<1x4x4096xf32> to vector<4x4096xf32>
    %c0_3 = arith.constant 0 : index
    %c0_4 = arith.constant 0 : index
    %c0_5 = arith.constant 0 : index
    %5 = vector.load %arg4[%c0_3, %c0_4, %c0_5] : memref<1x1x4096xi32, #tpu.memory_space<vmem>>, vector<1x1x4096xi32>
    %6 = vector.shape_cast %5 : vector<1x1x4096xi32> to vector<1x4096xi32>
    %cst = arith.constant dense<0xFF800000> : vector<4096xf32>
    %7 = vector.multi_reduction <maximumf>, %4, %cst [0] : vector<4x4096xf32> to vector<4096xf32>
    %8 = vector.shape_cast %7 : vector<4096xf32> to vector<1x4096xf32>
    %9 = vector.broadcast %8 : vector<1x4096xf32> to vector<4x4096xf32>
    %10 = arith.subf %4, %9 : vector<4x4096xf32>
    %11 = math.exp %10 : vector<4x4096xf32>
    %cst_6 = arith.constant dense<0.000000e+00> : vector<4096xf32>
    %12 = vector.multi_reduction <add>, %11, %cst_6 [0] : vector<4x4096xf32> to vector<4096xf32>
    %13 = vector.shape_cast %12 : vector<4096xf32> to vector<1x4096xf32>
    %14 = math.log %13 : vector<1x4096xf32>
    %15 = arith.addf %8, %14 : vector<1x4096xf32>
    %c0_i32_7 = arith.constant 0 : i32
    %16 = vector.broadcast %c0_i32_7 : i32 to vector<1x4096xi32>
    %17 = arith.cmpi eq, %6, %16 : vector<1x4096xi32>
    %18 = vector.extract_strided_slice %4 {offsets = [0, 0], sizes = [1, 4096], strides = [1, 1]} : vector<4x4096xf32> to vector<1x4096xf32>
    %cst_8 = arith.constant 0.000000e+00 : f32
    %19 = vector.broadcast %cst_8 : f32 to vector<1x4096xf32>
    %20 = arith.select %17, %18, %19 : vector<1x4096xi1>, vector<1x4096xf32>
    %c1_i32 = arith.constant 1 : i32
    %21 = vector.broadcast %c1_i32 : i32 to vector<1x4096xi32>
    %22 = arith.cmpi eq, %6, %21 : vector<1x4096xi32>
    %23 = vector.extract_strided_slice %4 {offsets = [1, 0], sizes = [1, 4096], strides = [1, 1]} : vector<4x4096xf32> to vector<1x4096xf32>
    %cst_9 = arith.constant 0.000000e+00 : f32
    %24 = vector.broadcast %cst_9 : f32 to vector<1x4096xf32>
    %25 = arith.select %22, %23, %24 : vector<1x4096xi1>, vector<1x4096xf32>
    %26 = arith.addf %20, %25 : vector<1x4096xf32>
    %c2_i32 = arith.constant 2 : i32
    %27 = vector.broadcast %c2_i32 : i32 to vector<1x4096xi32>
    %28 = arith.cmpi eq, %6, %27 : vector<1x4096xi32>
    %29 = vector.extract_strided_slice %4 {offsets = [2, 0], sizes = [1, 4096], strides = [1, 1]} : vector<4x4096xf32> to vector<1x4096xf32>
    %cst_10 = arith.constant 0.000000e+00 : f32
    %30 = vector.broadcast %cst_10 : f32 to vector<1x4096xf32>
    %31 = arith.select %28, %29, %30 : vector<1x4096xi1>, vector<1x4096xf32>
    %32 = arith.addf %26, %31 : vector<1x4096xf32>
    %c3_i32 = arith.constant 3 : i32
    %33 = vector.broadcast %c3_i32 : i32 to vector<1x4096xi32>
    %34 = arith.cmpi eq, %6, %33 : vector<1x4096xi32>
    %35 = vector.extract_strided_slice %4 {offsets = [3, 0], sizes = [1, 4096], strides = [1, 1]} : vector<4x4096xf32> to vector<1x4096xf32>
    %cst_11 = arith.constant 0.000000e+00 : f32
    %36 = vector.broadcast %cst_11 : f32 to vector<1x4096xf32>
    %37 = arith.select %34, %35, %36 : vector<1x4096xi1>, vector<1x4096xf32>
    %38 = arith.addf %32, %37 : vector<1x4096xf32>
    %39 = arith.subf %15, %38 : vector<1x4096xf32>
    %c0_12 = arith.constant 0 : index
    %c0_13 = arith.constant 0 : index
    %c0_14 = arith.constant 0 : index
    %c0_15 = arith.constant 0 : index
    %40 = vector.load %arg5[%c0_12, %c0_13, %c0_14, %c0_15] : memref<1x1x1x4096xf32, #tpu.memory_space<vmem>>, vector<1x1x1x4096xf32>
    %41 = vector.shape_cast %39 : vector<1x4096xf32> to vector<1x1x1x4096xf32>
    %42 = arith.addf %40, %41 : vector<1x1x1x4096xf32>
    %c0_16 = arith.constant 0 : index
    %c0_17 = arith.constant 0 : index
    %c0_18 = arith.constant 0 : index
    %c0_19 = arith.constant 0 : index
    %43 = vector.load %arg5[%c0_16, %c0_17, %c0_18, %c0_19] : memref<1x1x1x4096xf32, #tpu.memory_space<vmem>>, vector<1x1x1x4096xf32>
    tpu.vector_store %arg5[%c0_16, %c0_17, %c0_18, %c0_19], %42 {strides = array<i32>} : memref<1x1x1x4096xf32, #tpu.memory_space<vmem>>, vector<1x1x1x4096xf32>,
    return
  }
  func.func @transform_0(%arg0: i32, %arg1: i32, %arg2: i32) -> (i32, i32, i32) {
    %c1_i32 = arith.constant 1 : i32
    %0 = arith.muli %arg1, %c1_i32 : i32
    %1 = arith.addi %0, %arg2 : i32
    %c0_i32 = arith.constant 0 : i32
    %c0_i32_0 = arith.constant 0 : i32
    return %arg0, %c0_i32, %1 : i32, i32, i32
  }
  func.func @transform_1(%arg0: i32, %arg1: i32, %arg2: i32) -> (i32, i32, i32) {
    %c1_i32 = arith.constant 1 : i32
    %0 = arith.muli %arg1, %c1_i32 : i32
    %1 = arith.addi %0, %arg2 : i32
    %c0_i32 = arith.constant 0 : i32
    %c0_i32_0 = arith.constant 0 : i32
    return %arg0, %c0_i32, %1 : i32, i32, i32
  }
  func.func @transform_2(%arg0: i32, %arg1: i32, %arg2: i32) -> (i32, i32, i32, i32) {
    %c0_i32 = arith.constant 0 : i32
    %c0_i32_0 = arith.constant 0 : i32
    %c0_i32_1 = arith.constant 0 : i32
    return %arg0, %arg1, %c0_i32, %c0_i32_0 : i32, i32, i32, i32
  }
}

</mosaic_0001>

<llo_original>
// kernel: tpu_custom_call.1
$region0: #{tpu_custom_call.1}
  #allocation0 [shape = 'u32[]', space=smem, size = 0x4, offset = 0x4, fixed_abs, tag = 'smem constant byte address 0x4 - core index']
  #allocation1 [shape = 'u32[72,128]{1,0:T(1,128)}', space=vmem, size = 0x9000, scoped, tag = 'internal scratch']
  %s0 = inlined_call_operand.hbm [shape: f32[2,4,4096], index: 0, kind: input, shape index: {}]
  %s1 = inlined_call_operand.hbm [shape: s32[2,1,4096], index: 1, kind: input, shape index: {}]
  %s2 = inlined_call_operand.hbm [shape: f32[2,1,1,4096], index: 2, kind: output, shape index: {}]
  %s3 = sld [smem:[#allocation0]]
  $region53: #{tpu_custom_call.1} parent=0
    _
  %s5 = ssub.s32 1, %s3
  %s6 = scalar_select 0, %s5, %s3
  $region1: #{tpu_custom_call.1} parent=0
    #allocation2 [shape = 'u8[131072]{0}', space=vmem, size = 0x20000, scoped, tag = 'input window, operand 0']
    #allocation3 [shape = 's32[2]{0}', space=sflag, size = 0x8, scoped, tag = 'scoped memory for tpu_custom_call.1']
    #allocation4 [shape = 's32[2]{0}', space=sflag, size = 0x8, scoped, tag = 'scoped memory for tpu_custom_call.1']
    #allocation5 [shape = 'u8[32768]{0}', space=vmem, size = 0x8000, scoped, tag = 'input window, operand 1']
    #allocation6 [shape = 's32[2]{0}', space=sflag, size = 0x8, scoped, tag = 'scoped memory for tpu_custom_call.1']
    #allocation7 [shape = 'u8[32768]{0}', space=vmem, size = 0x8000, scoped, tag = 'output window, operand 0']
    %7 = vsyncpa [#allocation3], 0
    %s8 = scalar_lea.sflag [#allocation3], 1
    %9 = vsyncpa %s8, 0
    %10 = vsyncpa [#allocation6], 0
    %s11 = scalar_lea.sflag [#allocation6], 1
    %12 = vsyncpa %s11, 0
    %13 = vsyncpa [#allocation4], 0
    %s14 = scalar_lea.sflag [#allocation4], 1
    %15 = vsyncpa %s14, 0
    loop: start=0, step=1, limit=4
    $region2: #{tpu_custom_call.1} parent=1 // loop_pre_header
      _
    $region3: #{tpu_custom_call.1} parent=1 // loop_header
      %s17 = sphi 0, %s21
      %p18 = scmp.ge.s32.totalorder %s17, 4
      %s24 = sphi 0, %s43
      %s25 = sphi 0, %s39
      %s26 = sphi 0, %s35
      %s27 = sphi 0, %s24
      %s28 = sphi 0, %s25
      %s29 = sphi 0, %s26
      %s30 = sphi 0, %s27
      %s31 = sphi 0, %s28
      %s32 = sphi 0, %s29
      %s50 = sphi 0, %s52
      %s53 = sphi 0, %s50
      %s54 = sphi 0, %s53
      %s70 = sphi 0, %s54
      %s80 = sphi 0, %s82
      %s83 = sphi 0, %s80
      %s84 = sphi 0, %s83
      %s100 = sphi 0, %s84
      %s108 = sphi 0, %s110
      %s111 = sphi 0, %s108
      %s112 = sphi 0, %s111
      %s128 = sphi 0, %s112
    $region4: #{tpu_custom_call.1} parent=1 // loop_header_branch
      %20 = sbr.rel (%p18) target = $region8
    $region5: #{tpu_custom_call.1} parent=1 // loop_body
      %s22 = ssub.s32 %s17, 1
      %s23 = ssub.s32 %s17, 2
      %s33 = sadd.s32 1, %s26
      %p34 = scmp.ge.s32.totalorder %s33, 1
      %s35 = scalar_select %p34, 0, %s33
      %s36 = sadd.s32 1, %s25
      %s37 = scalar_select %p34, %s36, %s25
      %p38 = scmp.ge.s32.totalorder %s37, 1
      %s39 = scalar_select %p38, 0, %s37
      %s40 = sadd.s32 1, %s24
      %s41 = scalar_select %p38, %s40, %s24
      %p42 = scmp.ge.s32.totalorder %s41, 2
      %s43 = scalar_select %p42, 0, %s41
      %s44 = sadd.s32 %s25, %s26
      %s45 = sadd.s32 %s39, %s35
      %s46 = ssub.s32 %s24, %s43
      %s47 = ssub.s32 %s44, %s45
      %s48 = sor.u32 %s46, %s47
      %p49 = scmp.eq.s32.totalorder %s48, 0
      %s51 = sadd.s32 %s50, 1
      %s52 = scalar_select %p49, %s50, %s51
      %p55 = pneg %p49
      %p56 = scmp.eq.s32.totalorder %s17, 1
      %p57 = por %p55, %p56
      %p58 = scmp.ne.s32.totalorder %s50, %s53
      %p59 = scmp.eq.s32.totalorder %s17, 0
      %p60 = por %p58, %p59
      %p61 = scmp.ne.s32.totalorder %s50, %s53
      %p62 = scmp.eq.s32.totalorder %s22, 1
      %p63 = por %p61, %p62
      %p64 = scmp.ne.s32.totalorder %s53, %s54
      %p65 = scmp.eq.s32.totalorder %s22, 0
      %p66 = por %p64, %p65
      %p67 = scmp.ne.s32.totalorder %s53, %s54
      %p68 = scmp.eq.s32.totalorder %s23, 1
      %p69 = por %p67, %p68
      %p71 = scmp.ne.s32.totalorder %s54, %s70
      %p72 = scmp.eq.s32.totalorder %s23, 0
      %p73 = por %p71, %p72
      %s74 = sadd.s32 %s25, %s26
      %s75 = sadd.s32 %s39, %s35
      %s76 = ssub.s32 %s24, %s43
      %s77 = ssub.s32 %s74, %s75
      %s78 = sor.u32 %s76, %s77
      %p79 = scmp.eq.s32.totalorder %s78, 0
      %s81 = sadd.s32 %s80, 1
      %s82 = scalar_select %p79, %s80, %s81
      %p85 = pneg %p79
      %p86 = scmp.eq.s32.totalorder %s17, 1
      %p87 = por %p85, %p86
      %p88 = scmp.ne.s32.totalorder %s80, %s83
      %p89 = scmp.eq.s32.totalorder %s17, 0
      %p90 = por %p88, %p89
      %p91 = scmp.ne.s32.totalorder %s80, %s83
      %p92 = scmp.eq.s32.totalorder %s22, 1
      %p93 = por %p91, %p92
      %p94 = scmp.ne.s32.totalorder %s83, %s84
      %p95 = scmp.eq.s32.totalorder %s22, 0
      %p96 = por %p94, %p95
      %p97 = scmp.ne.s32.totalorder %s83, %s84
      %p98 = scmp.eq.s32.totalorder %s23, 1
      %p99 = por %p97, %p98
      %p101 = scmp.ne.s32.totalorder %s84, %s100
      %p102 = scmp.eq.s32.totalorder %s23, 0
      %p103 = por %p101, %p102
      %s104 = ssub.s32 %s24, %s43
      %s105 = ssub.s32 %s25, %s39
      %s106 = sor.u32 %s104, %s105
      %p107 = scmp.eq.s32.totalorder %s106, 0
      %s109 = sadd.s32 %s108, 1
      %s110 = scalar_select %p107, %s108, %s109
      %p113 = pneg %p107
      %p114 = scmp.eq.s32.totalorder %s17, 1
      %p115 = por %p113, %p114
      %p116 = scmp.ne.s32.totalorder %s108, %s111
      %p117 = scmp.eq.s32.totalorder %s17, 0
      %p118 = por %p116, %p117
      %p119 = scmp.ne.s32.totalorder %s108, %s111
      %p120 = scmp.eq.s32.totalorder %s22, 1
      %p121 = por %p119, %p120
      %p122 = scmp.ne.s32.totalorder %s111, %s112
      %p123 = scmp.eq.s32.totalorder %s22, 0
      %p124 = por %p122, %p123
      %p125 = scmp.ne.s32.totalorder %s111, %s112
      %p126 = scmp.eq.s32.totalorder %s23, 1
      %p127 = por %p125, %p126
      %p129 = scmp.ne.s32.totalorder %s112, %s128
      %p130 = scmp.eq.s32.totalorder %s23, 0
      %p131 = por %p129, %p130
      %p132 = scmp.le.s32.totalorder 1, %s17
      %p133 = scmp.lt.s32.totalorder %s17, 3
      %p134 = pnand %p132, %p133
      %p135 = pneg %p134
      // Predicated region
      $region9: #{tpu_custom_call.1} parent=5 // pred_check
        _
      $region10: #{tpu_custom_call.1} parent=5 // pred_check_branch
        %137 = sbr.rel (%p134) target = $region12
      $region11: #{tpu_custom_call.1} parent=5 // pred_region
        %s138 = ssub.s32 %s17, 1
      $region12: #{tpu_custom_call.1} parent=5 // pred_fallthru
        _
      %p139 = scmp.lt.s32.totalorder %s17, 2
      // Predicated region
      $region13: #{tpu_custom_call.1} parent=5 // pred_check
        %p140 = pneg %p139
      $region14: #{tpu_custom_call.1} parent=5 // pred_check_branch
        %142 = sbr.rel (%p140) target = $region16
      $region15: #{tpu_custom_call.1} parent=5 // pred_region
        // Predicated region
        $region17: #{tpu_custom_call.1} parent=15 // pred_check
          %p143 = pneg %p60
        $region18: #{tpu_custom_call.1} parent=15 // pred_check_branch
          %145 = sbr.rel (%p143) target = $region20
        $region19: #{tpu_custom_call.1} parent=15 // pred_region
          %s146 = sand.u32 %s50, 1
          %s147 = scalar_lea.sflag [#allocation3], %s146
          %s148 = sand.u32 %s50, 1
          %s149 = smul.addr %s148, 128
          %s150 = scalar_lea.vmem [#allocation2], %s149
          %s151 = sadd.s32 %s25, %s26
          %s152 = smul.u32 32, %s151
          %154 = vsyncadd %s147, 0
          %s155 = smul.addr %s24, 32
          %s156 = sadd.s32 %s152, %s155
          %s157 = smul.addr %s156, 4
          %s158 = scalar_lea.hbm %s0, %s157
          %s160 = sshll.u32 %s158, 4
          %s161 = int_to_ptr.hbm [resolvable:$true] %s160
          %s162 = sshll.u32 %s150, 4
          %s163 = int_to_ptr.vmem [resolvable:$true] %s162
          %165 = dma.hbm_to_vmem [thread:$0]  %s161, 2048, %s163, %s147
        $region20: #{tpu_custom_call.1} parent=15 // pred_fallthru
          _
        // Predicated region
        $region21: #{tpu_custom_call.1} parent=15 // pred_check
          %p166 = pneg %p90
        $region22: #{tpu_custom_call.1} parent=15 // pred_check_branch
          %168 = sbr.rel (%p166) target = $region24
        $region23: #{tpu_custom_call.1} parent=15 // pred_region
          %s169 = sand.u32 %s80, 1
          %s170 = scalar_lea.sflag [#allocation6], %s169
          %s171 = sand.u32 %s80, 1
          %s172 = smul.addr %s171, 32
          %s173 = scalar_lea.vmem [#allocation5], %s172
          %s174 = sadd.s32 %s25, %s26
          %s175 = smul.u32 32, %s174
          %177 = vsyncadd %s170, 0
          %s178 = smul.addr %s24, 32
          %s179 = sadd.s32 %s175, %s178
          %s180 = scalar_lea.hbm %s1, %s179
          %s182 = sshll.u32 %s180, 4
          %s183 = int_to_ptr.hbm [resolvable:$true] %s182
          %s184 = sshll.u32 %s173, 4
          %s185 = int_to_ptr.vmem [resolvable:$true] %s184
          %187 = dma.hbm_to_vmem [thread:$0]  %s183, 512, %s185, %s170
        $region24: #{tpu_custom_call.1} parent=15 // pred_fallthru
          _
      $region16: #{tpu_custom_call.1} parent=5 // pred_fallthru
        _
      %p188 = scmp.le.s32.totalorder 1, %s17
      %p189 = scmp.lt.s32.totalorder %s17, 3
      %p190 = pnand %p188, %p189
      %p191 = pneg %p190
      // Predicated region
      $region25: #{tpu_custom_call.1} parent=5 // pred_check
        _
      $region26: #{tpu_custom_call.1} parent=5 // pred_check_branch
        %193 = sbr.rel (%p190) target = $region28
      $region27: #{tpu_custom_call.1} parent=5 // pred_region
        %s194 = ssub.s32 %s17, 1
        %s195 = sand.u32 %s53, 1
        %s196 = scalar_lea.sflag [#allocation3], %s195
        %s197 = sand.u32 %s53, 1
        %s198 = smul.addr %s197, 128
        %s199 = scalar_lea.vmem [#allocation2], %s198
        // Predicated region
        $region29: #{tpu_custom_call.1} parent=27 // pred_check
          %p200 = pneg %p66
        $region30: #{tpu_custom_call.1} parent=27 // pred_check_branch
          %202 = sbr.rel (%p200) target = $region32
        $region31: #{tpu_custom_call.1} parent=27 // pred_region
          %204 = dma.done %s196, 2048
        $region32: #{tpu_custom_call.1} parent=27 // pred_fallthru
          _
        %s205 = sand.u32 %s83, 1
        %s206 = scalar_lea.sflag [#allocation6], %s205
        %s207 = sand.u32 %s83, 1
        %s208 = smul.addr %s207, 32
        %s209 = scalar_lea.vmem [#allocation5], %s208
        // Predicated region
        $region33: #{tpu_custom_call.1} parent=27 // pred_check
          %p210 = pneg %p96
        $region34: #{tpu_custom_call.1} parent=27 // pred_check_branch
          %212 = sbr.rel (%p210) target = $region36
        $region35: #{tpu_custom_call.1} parent=27 // pred_region
          %214 = dma.done %s206, 512
        $region36: #{tpu_custom_call.1} parent=27 // pred_fallthru
          _
        %s215 = sand.u32 %s53, 1
        %s216 = scalar_lea.sflag [#allocation3], %s215
        %s217 = sand.u32 %s53, 1
        %s218 = smul.addr %s217, 128
        %s219 = scalar_lea.vmem [#allocation2], %s218
        %p220 = pneg %p66
        %p221 = pneg %p63
        %s222 = sand.u32 %s83, 1
        %s223 = scalar_lea.sflag [#allocation6], %s222
        %s224 = sand.u32 %s83, 1
        %s225 = smul.addr %s224, 32
        %s226 = scalar_lea.vmem [#allocation5], %s225
        %p227 = pneg %p96
        %p228 = pneg %p93
        %p229 = pneg %p124
        %p230 = pneg %p121
        %s231 = sand.u32 %s111, 1
        %s232 = scalar_lea.sflag [#allocation4], %s231
        %s233 = sand.u32 %s111, 1
        %s234 = smul.addr %s233, 32
        %s235 = scalar_lea.vmem [#allocation7], %s234
        %s236 = sadd.s32 %s28, %s29
        %s237 = smul.u32 32, %s236
        %s238 = sadd.s32 %s28, %s29
        %s239 = smul.u32 32, %s238
        %p240 = scmp.eq.s32.totalorder %s29, 0
        // Predicated region
        $region37: #{tpu_custom_call.1} parent=27 // pred_check
          %p241 = pneg %p240
        $region38: #{tpu_custom_call.1} parent=27 // pred_check_branch
          %243 = sbr.rel (%p241) target = $region40
        $region39: #{tpu_custom_call.1} parent=27 // pred_region
          %244 = vst [vmem:[%s235] sm:$0xff] 0.0
          %245 = vst [vmem:[%s235 + $0x8] sm:$0xff] 0.0
          %246 = vst [vmem:[%s235 + $0x10] sm:$0xff] 0.0
          %247 = vst [vmem:[%s235 + $0x18] sm:$0xff] 0.0
        $region40: #{tpu_custom_call.1} parent=27 // pred_fallthru
          _
        %v248 = vld [vmem:[%s199] sm:$0xff]
        %v249 = vld [vmem:[%s199 + $0x8] sm:$0xff]
        %v250 = vld [vmem:[%s199 + $0x10] sm:$0xff]
        %v251 = vld [vmem:[%s199 + $0x18] sm:$0xff]
        %v252 = vld [vmem:[%s199 + $0x20] sm:$0xff]
        %v253 = vld [vmem:[%s199 + $0x28] sm:$0xff]
        %v254 = vld [vmem:[%s199 + $0x30] sm:$0xff]
        %v255 = vld [vmem:[%s199 + $0x38] sm:$0xff]
        %v256 = vld [vmem:[%s199 + $0x40] sm:$0xff]
        %v257 = vld [vmem:[%s199 + $0x48] sm:$0xff]
        %v258 = vld [vmem:[%s199 + $0x50] sm:$0xff]
        %v259 = vld [vmem:[%s199 + $0x58] sm:$0xff]
        %v260 = vld [vmem:[%s199 + $0x60] sm:$0xff]
        %v261 = vld [vmem:[%s199 + $0x68] sm:$0xff]
        %v262 = vld [vmem:[%s199 + $0x70] sm:$0xff]
        %v263 = vld [vmem:[%s199 + $0x78] sm:$0xff]
        %v264 = vld [vmem:[%s209] sm:$0xff]
        %v265 = vld [vmem:[%s209 + $0x8] sm:$0xff]
        %v266 = vld [vmem:[%s209 + $0x10] sm:$0xff]
        %v267 = vld [vmem:[%s209 + $0x18] sm:$0xff]
        %284 = vst [vmem:[#allocation1] ss:$2 sm:$0xff] %v248
        %s285 = scalar_lea.vmem [#allocation1], 16
        %286 = vst [vmem:[%s285] ss:$2 sm:$0xff] %v249
        %s287 = scalar_lea.vmem [#allocation1], 32
        %288 = vst [vmem:[%s287] ss:$2 sm:$0xff] %v250
        %s289 = scalar_lea.vmem [#allocation1], 48
        %290 = vst [vmem:[%s289] ss:$2 sm:$0xff] %v251
        %v291 = vld.sshfl [vmem:[#allocation1] sm:$0xff pattern:$0x75316420]
        %v292 = vld.sshfl [vmem:[#allocation1 + $0x8] sm:$0xff pattern:$0x75316420]
        %v293 = vld.sshfl [vmem:[#allocation1 + $0x10] sm:$0xff pattern:$0x75316420]
        %v294 = vld.sshfl [vmem:[#allocation1 + $0x18] sm:$0xff pattern:$0x75316420]
        %v295 = vld.sshfl [vmem:[#allocation1 + $0x20] sm:$0xff pattern:$0x75316420]
        %v296 = vld.sshfl [vmem:[#allocation1 + $0x28] sm:$0xff pattern:$0x75316420]
        %v297 = vld.sshfl [vmem:[#allocation1 + $0x30] sm:$0xff pattern:$0x75316420]
        %v298 = vld.sshfl [vmem:[#allocation1 + $0x38] sm:$0xff pattern:$0x75316420]
        %299 = vst [vmem:[#allocation1] ss:$2 sm:$0xff] %v252
        %300 = vst [vmem:[%s285] ss:$2 sm:$0xff] %v253
        %301 = vst [vmem:[%s287] ss:$2 sm:$0xff] %v254
        %302 = vst [vmem:[%s289] ss:$2 sm:$0xff] %v255
        %v303 = vld.sshfl [vmem:[#allocation1] sm:$0xff pattern:$0x75316420]
        %v304 = vld.sshfl [vmem:[#allocation1 + $0x8] sm:$0xff pattern:$0x75316420]
        %v305 = vld.sshfl [vmem:[#allocation1 + $0x10] sm:$0xff pattern:$0x75316420]
        %v306 = vld.sshfl [vmem:[#allocation1 + $0x18] sm:$0xff pattern:$0x75316420]
        %v307 = vld.sshfl [vmem:[#allocation1 + $0x20] sm:$0xff pattern:$0x75316420]
        %v308 = vld.sshfl [vmem:[#allocation1 + $0x28] sm:$0xff pattern:$0x75316420]
        %v309 = vld.sshfl [vmem:[#allocation1 + $0x30] sm:$0xff pattern:$0x75316420]
        %v310 = vld.sshfl [vmem:[#allocation1 + $0x38] sm:$0xff pattern:$0x75316420]
        %311 = vst [vmem:[#allocation1] ss:$2 sm:$0xff] %v256
        %312 = vst [vmem:[%s285] ss:$2 sm:$0xff] %v257
        %313 = vst [vmem:[%s287] ss:$2 sm:$0xff] %v258
        %314 = vst [vmem:[%s289] ss:$2 sm:$0xff] %v259
        %v315 = vld.sshfl [vmem:[#allocation1] sm:$0xff pattern:$0x75316420]
        %v316 = vld.sshfl [vmem:[#allocation1 + $0x8] sm:$0xff pattern:$0x75316420]
        %v317 = vld.sshfl [vmem:[#allocation1 + $0x10] sm:$0xff pattern:$0x75316420]
        %v318 = vld.sshfl [vmem:[#allocation1 + $0x18] sm:$0xff pattern:$0x75316420]
        %v319 = vld.sshfl [vmem:[#allocation1 + $0x20] sm:$0xff pattern:$0x75316420]
        %v320 = vld.sshfl [vmem:[#allocation1 + $0x28] sm:$0xff pattern:$0x75316420]
        %v321 = vld.sshfl [vmem:[#allocation1 + $0x30] sm:$0xff pattern:$0x75316420]
        %v322 = vld.sshfl [vmem:[#allocation1 + $0x38] sm:$0xff pattern:$0x75316420]
        %323 = vst [vmem:[#allocation1] ss:$2 sm:$0xff] %v260
        %324 = vst [vmem:[%s285] ss:$2 sm:$0xff] %v261
        %325 = vst [vmem:[%s287] ss:$2 sm:$0xff] %v262
        %326 = vst [vmem:[%s289] ss:$2 sm:$0xff] %v263
        %v327 = vld.sshfl [vmem:[#allocation1] sm:$0xff pattern:$0x75316420]
        %v328 = vld.sshfl [vmem:[#allocation1 + $0x8] sm:$0xff pattern:$0x75316420]
        %v329 = vld.sshfl [vmem:[#allocation1 + $0x10] sm:$0xff pattern:$0x75316420]
        %v330 = vld.sshfl [vmem:[#allocation1 + $0x18] sm:$0xff pattern:$0x75316420]
        %v331 = vld.sshfl [vmem:[#allocation1 + $0x20] sm:$0xff pattern:$0x75316420]
        %v332 = vld.sshfl [vmem:[#allocation1 + $0x28] sm:$0xff pattern:$0x75316420]
        %v333 = vld.sshfl [vmem:[#allocation1 + $0x30] sm:$0xff pattern:$0x75316420]
        %v334 = vld.sshfl [vmem:[#allocation1 + $0x38] sm:$0xff pattern:$0x75316420]
        %vm367 = vcmask 1043456
        %v368 = vsel %vm367, %v291, -inf
        %v369 = vrot.slane %v368, 4
        %v370 = vmax.f32 %v368, %v369
        %v371 = vrot.slane %v370, 2
        %v372 = vmax.f32 %v370, %v371
        %v373 = vrot.slane %v372, 1
        %v374 = vmax.f32 %v372, %v373
        %v375 = vsel %vm367, %v292, -inf
        %v376 = vrot.slane %v375, 4
        %v377 = vmax.f32 %v375, %v376
        %v378 = vrot.slane %v377, 2
        %v379 = vmax.f32 %v377, %v378
        %v380 = vrot.slane %v379, 1
        %v381 = vmax.f32 %v379, %v380
        %v382 = vsel %vm367, %v293, -inf
        %v383 = vrot.slane %v382, 4
        %v384 = vmax.f32 %v382, %v383
        %v385 = vrot.slane %v384, 2
        %v386 = vmax.f32 %v384, %v385
        %v387 = vrot.slane %v386, 1
        %v388 = vmax.f32 %v386, %v387
        %v389 = vsel %vm367, %v294, -inf
        %v390 = vrot.slane %v389, 4
        %v391 = vmax.f32 %v389, %v390
        %v392 = vrot.slane %v391, 2
        %v393 = vmax.f32 %v391, %v392
        %v394 = vrot.slane %v393, 1
        %v395 = vmax.f32 %v393, %v394
        %v396 = vsel %vm367, %v295, -inf
        %v397 = vrot.slane %v396, 4
        %v398 = vmax.f32 %v396, %v397
        %v399 = vrot.slane %v398, 2
        %v400 = vmax.f32 %v398, %v399
        %v401 = vrot.slane %v400, 1
        %v402 = vmax.f32 %v400, %v401
        %v403 = vsel %vm367, %v296, -inf
        %v404 = vrot.slane %v403, 4
        %v405 = vmax.f32 %v403, %v404
        %v406 = vrot.slane %v405, 2
        %v407 = vmax.f32 %v405, %v406
        %v408 = vrot.slane %v407, 1
        %v409 = vmax.f32 %v407, %v408
        %v410 = vsel %vm367, %v297, -inf
        %v411 = vrot.slane %v410, 4
        %v412 = vmax.f32 %v410, %v411
        %v413 = vrot.slane %v412, 2
        %v414 = vmax.f32 %v412, %v413
        %v415 = vrot.slane %v414, 1
        %v416 = vmax.f32 %v414, %v415
        %v417 = vsel %vm367, %v298, -inf
        %v418 = vrot.slane %v417, 4
        %v419 = vmax.f32 %v417, %v418
        %v420 = vrot.slane %v419, 2
        %v421 = vmax.f32 %v419, %v420
        %v422 = vrot.slane %v421, 1
        %v423 = vmax.f32 %v421, %v422
        %v424 = vsel %vm367, %v303, -inf
        %v425 = vrot.slane %v424, 4
        %v426 = vmax.f32 %v424, %v425
        %v427 = vrot.slane %v426, 2
        %v428 = vmax.f32 %v426, %v427
        %v429 = vrot.slane %v428, 1
        %v430 = vmax.f32 %v428, %v429
        %v431 = vsel %vm367, %v304, -inf
        %v432 = vrot.slane %v431, 4
        %v433 = vmax.f32 %v431, %v432
        %v434 = vrot.slane %v433, 2
        %v435 = vmax.f32 %v433, %v434
        %v436 = vrot.slane %v435, 1
        %v437 = vmax.f32 %v435, %v436
        %v438 = vsel %vm367, %v305, -inf
        %v439 = vrot.slane %v438, 4
        %v440 = vmax.f32 %v438, %v439
        %v441 = vrot.slane %v440, 2
        %v442 = vmax.f32 %v440, %v441
        %v443 = vrot.slane %v442, 1
        %v444 = vmax.f32 %v442, %v443
        %v445 = vsel %vm367, %v306, -inf
        %v446 = vrot.slane %v445, 4
        %v447 = vmax.f32 %v445, %v446
        %v448 = vrot.slane %v447, 2
        %v449 = vmax.f32 %v447, %v448
        %v450 = vrot.slane %v449, 1
        %v451 = vmax.f32 %v449, %v450
        %v452 = vsel %vm367, %v307, -inf
        %v453 = vrot.slane %v452, 4
        %v454 = vmax.f32 %v452, %v453
        %v455 = vrot.slane %v454, 2
        %v456 = vmax.f32 %v454, %v455
        %v457 = vrot.slane %v456, 1
        %v458 = vmax.f32 %v456, %v457
        %v459 = vsel %vm367, %v308, -inf
        %v460 = vrot.slane %v459, 4
        %v461 = vmax.f32 %v459, %v460
        %v462 = vrot.slane %v461, 2
        %v463 = vmax.f32 %v461, %v462
        %v464 = vrot.slane %v463, 1
        %v465 = vmax.f32 %v463, %v464
        %v466 = vsel %vm367, %v309, -inf
        %v467 = vrot.slane %v466, 4
        %v468 = vmax.f32 %v466, %v467
        %v469 = vrot.slane %v468, 2
        %v470 = vmax.f32 %v468, %v469
        %v471 = vrot.slane %v470, 1
        %v472 = vmax.f32 %v470, %v471
        %v473 = vsel %vm367, %v310, -inf
        %v474 = vrot.slane %v473, 4
        %v475 = vmax.f32 %v473, %v474
        %v476 = vrot.slane %v475, 2
        %v477 = vmax.f32 %v475, %v476
        %v478 = vrot.slane %v477, 1
        %v479 = vmax.f32 %v477, %v478
        %v480 = vsel %vm367, %v315, -inf
        %v481 = vrot.slane %v480, 4
        %v482 = vmax.f32 %v480, %v481
        %v483 = vrot.slane %v482, 2
        %v484 = vmax.f32 %v482, %v483
        %v485 = vrot.slane %v484, 1
        %v486 = vmax.f32 %v484, %v485
        %v487 = vsel %vm367, %v316, -inf
        %v488 = vrot.slane %v487, 4
        %v489 = vmax.f32 %v487, %v488
        %v490 = vrot.slane %v489, 2
        %v491 = vmax.f32 %v489, %v490
        %v492 = vrot.slane %v491, 1
        %v493 = vmax.f32 %v491, %v492
        %v494 = vsel %vm367, %v317, -inf
        %v495 = vrot.slane %v494, 4
        %v496 = vmax.f32 %v494, %v495
        %v497 = vrot.slane %v496, 2
        %v498 = vmax.f32 %v496, %v497
        %v499 = vrot.slane %v498, 1
        %v500 = vmax.f32 %v498, %v499
        %v501 = vsel %vm367, %v318, -inf
        %v502 = vrot.slane %v501, 4
        %v503 = vmax.f32 %v501, %v502
        %v504 = vrot.slane %v503, 2
        %v505 = vmax.f32 %v503, %v504
        %v506 = vrot.slane %v505, 1
        %v507 = vmax.f32 %v505, %v506
        %v508 = vsel %vm367, %v319, -inf
        %v509 = vrot.slane %v508, 4
        %v510 = vmax.f32 %v508, %v509
        %v511 = vrot.slane %v510, 2
        %v512 = vmax.f32 %v510, %v511
        %v513 = vrot.slane %v512, 1
        %v514 = vmax.f32 %v512, %v513
        %v515 = vsel %vm367, %v320, -inf
        %v516 = vrot.slane %v515, 4
        %v517 = vmax.f32 %v515, %v516
        %v518 = vrot.slane %v517, 2
        %v519 = vmax.f32 %v517, %v518
        %v520 = vrot.slane %v519, 1
        %v521 = vmax.f32 %v519, %v520
        %v522 = vsel %vm367, %v321, -inf
        %v523 = vrot.slane %v522, 4
        %v524 = vmax.f32 %v522, %v523
        %v525 = vrot.slane %v524, 2
        %v526 = vmax.f32 %v524, %v525
        %v527 = vrot.slane %v526, 1
        %v528 = vmax.f32 %v526, %v527
        %v529 = vsel %vm367, %v322, -inf
        %v530 = vrot.slane %v529, 4
        %v531 = vmax.f32 %v529, %v530
        %v532 = vrot.slane %v531, 2
        %v533 = vmax.f32 %v531, %v532
        %v534 = vrot.slane %v533, 1
        %v535 = vmax.f32 %v533, %v534
        %v536 = vsel %vm367, %v327, -inf
        %v537 = vrot.slane %v536, 4
        %v538 = vmax.f32 %v536, %v537
        %v539 = vrot.slane %v538, 2
        %v540 = vmax.f32 %v538, %v539
        %v541 = vrot.slane %v540, 1
        %v542 = vmax.f32 %v540, %v541
        %v543 = vsel %vm367, %v328, -inf
        %v544 = vrot.slane %v543, 4
        %v545 = vmax.f32 %v543, %v544
        %v546 = vrot.slane %v545, 2
        %v547 = vmax.f32 %v545, %v546
        %v548 = vrot.slane %v547, 1
        %v549 = vmax.f32 %v547, %v548
        %v550 = vsel %vm367, %v329, -inf
        %v551 = vrot.slane %v550, 4
        %v552 = vmax.f32 %v550, %v551
        %v553 = vrot.slane %v552, 2
        %v554 = vmax.f32 %v552, %v553
        %v555 = vrot.slane %v554, 1
        %v556 = vmax.f32 %v554, %v555
        %v557 = vsel %vm367, %v330, -inf
        %v558 = vrot.slane %v557, 4
        %v559 = vmax.f32 %v557, %v558
        %v560 = vrot.slane %v559, 2
        %v561 = vmax.f32 %v559, %v560
        %v562 = vrot.slane %v561, 1
        %v563 = vmax.f32 %v561, %v562
        %v564 = vsel %vm367, %v331, -inf
        %v565 = vrot.slane %v564, 4
        %v566 = vmax.f32 %v564, %v565
        %v567 = vrot.slane %v566, 2
        %v568 = vmax.f32 %v566, %v567
        %v569 = vrot.slane %v568, 1
        %v570 = vmax.f32 %v568, %v569
        %v571 = vsel %vm367, %v332, -inf
        %v572 = vrot.slane %v571, 4
        %v573 = vmax.f32 %v571, %v572
        %v574 = vrot.slane %v573, 2
        %v575 = vmax.f32 %v573, %v574
        %v576 = vrot.slane %v575, 1
        %v577 = vmax.f32 %v575, %v576
        %v578 = vsel %vm367, %v333, -inf
        %v579 = vrot.slane %v578, 4
        %v580 = vmax.f32 %v578, %v579
        %v581 = vrot.slane %v580, 2
        %v582 = vmax.f32 %v580, %v581
        %v583 = vrot.slane %v582, 1
        %v584 = vmax.f32 %v582, %v583
        %v585 = vsel %vm367, %v334, -inf
        %v586 = vrot.slane %v585, 4
        %v587 = vmax.f32 %v585, %v586
        %v588 = vrot.slane %v587, 2
        %v589 = vmax.f32 %v587, %v588
        %v590 = vrot.slane %v589, 1
        %v591 = vmax.f32 %v589, %v590
        %v624 = vrot.slane %v381, 4
        %v625 = vrot.slane %v395, 4
        %v626 = vrot.slane %v409, 4
        %v627 = vrot.slane %v423, 4
        %v628 = vrot.slane %v437, 4
        %v629 = vrot.slane %v451, 4
        %v630 = vrot.slane %v465, 4
        %v631 = vrot.slane %v479, 4
        %v632 = vrot.slane %v493, 4
        %v633 = vrot.slane %v507, 4
        %v634 = vrot.slane %v521, 4
        %v635 = vrot.slane %v535, 4
        %v636 = vrot.slane %v549, 4
        %v637 = vrot.slane %v563, 4
        %v638 = vrot.slane %v577, 4
        %v639 = vrot.slane %v591, 4
        %v640 = vsel %vm367, %v374, %v624
        %v641 = vsel %vm367, %v388, %v625
        %v642 = vsel %vm367, %v402, %v626
        %v643 = vsel %vm367, %v416, %v627
        %v644 = vsel %vm367, %v430, %v628
        %v645 = vsel %vm367, %v444, %v629
        %v646 = vsel %vm367, %v458, %v630
        %v647 = vsel %vm367, %v472, %v631
        %v648 = vsel %vm367, %v486, %v632
        %v649 = vsel %vm367, %v500, %v633
        %v650 = vsel %vm367, %v514, %v634
        %v651 = vsel %vm367, %v528, %v635
        %v652 = vsel %vm367, %v542, %v636
        %v653 = vsel %vm367, %v556, %v637
        %v654 = vsel %vm367, %v570, %v638
        %v655 = vsel %vm367, %v584, %v639
        %v672 = vsub.f32 %v248, %v640
        %v673 = vsub.f32 %v249, %v641
        %v674 = vsub.f32 %v250, %v642
        %v675 = vsub.f32 %v251, %v643
        %v676 = vsub.f32 %v252, %v644
        %v677 = vsub.f32 %v253, %v645
        %v678 = vsub.f32 %v254, %v646
        %v679 = vsub.f32 %v255, %v647
        %v680 = vsub.f32 %v256, %v648
        %v681 = vsub.f32 %v257, %v649
        %v682 = vsub.f32 %v258, %v650
        %v683 = vsub.f32 %v259, %v651
        %v684 = vsub.f32 %v260, %v652
        %v685 = vsub.f32 %v261, %v653
        %v686 = vsub.f32 %v262, %v654
        %v687 = vsub.f32 %v263, %v655
        %v688 = vmul.f32 %v672, 1.442695
        %v689 = vpow.pop %v688
        %v690 = vmul.f32 %v673, 1.442695
        %v691 = vpow.pop %v690
        %v692 = vmul.f32 %v674, 1.442695
        %v693 = vpow.pop %v692
        %v694 = vmul.f32 %v675, 1.442695
        %v695 = vpow.pop %v694
        %v696 = vmul.f32 %v676, 1.442695
        %v697 = vpow.pop %v696
        %v698 = vmul.f32 %v677, 1.442695
        %v699 = vpow.pop %v698
        %v700 = vmul.f32 %v678, 1.442695
        %v701 = vpow.pop %v700
        %v702 = vmul.f32 %v679, 1.442695
        %v703 = vpow.pop %v702
        %v704 = vmul.f32 %v680, 1.442695
        %v705 = vpow.pop %v704
        %v706 = vmul.f32 %v681, 1.442695
        %v707 = vpow.pop %v706
        %v708 = vmul.f32 %v682, 1.442695
        %v709 = vpow.pop %v708
        %v710 = vmul.f32 %v683, 1.442695
        %v711 = vpow.pop %v710
        %v712 = vmul.f32 %v684, 1.442695
        %v713 = vpow.pop %v712
        %v714 = vmul.f32 %v685, 1.442695
        %v715 = vpow.pop %v714
        %v716 = vmul.f32 %v686, 1.442695
        %v717 = vpow.pop %v716
        %v718 = vmul.f32 %v687, 1.442695
        %v719 = vpow.pop %v718
        %736 = vst [vmem:[#allocation1] ss:$2 sm:$0xff] %v689
        %s737 = scalar_lea.vmem [#allocation1], 16
        %738 = vst [vmem:[%s737] ss:$2 sm:$0xff] %v691
        %s739 = scalar_lea.vmem [#allocation1], 32
        %740 = vst [vmem:[%s739] ss:$2 sm:$0xff] %v693
        %s741 = scalar_lea.vmem [#allocation1], 48
        %742 = vst [vmem:[%s741] ss:$2 sm:$0xff] %v695
        %v743 = vld.sshfl [vmem:[#allocation1] sm:$0xff pattern:$0x75316420]
        %v744 = vld.sshfl [vmem:[#allocation1 + $0x8] sm:$0xff pattern:$0x75316420]
        %v745 = vld.sshfl [vmem:[#allocation1 + $0x10] sm:$0xff pattern:$0x75316420]
        %v746 = vld.sshfl [vmem:[#allocation1 + $0x18] sm:$0xff pattern:$0x75316420]
        %v747 = vld.sshfl [vmem:[#allocation1 + $0x20] sm:$0xff pattern:$0x75316420]
        %v748 = vld.sshfl [vmem:[#allocation1 + $0x28] sm:$0xff pattern:$0x75316420]
        %v749 = vld.sshfl [vmem:[#allocation1 + $0x30] sm:$0xff pattern:$0x75316420]
        %v750 = vld.sshfl [vmem:[#allocation1 + $0x38] sm:$0xff pattern:$0x75316420]
        %751 = vst [vmem:[#allocation1] ss:$2 sm:$0xff] %v697
        %752 = vst [vmem:[%s737] ss:$2 sm:$0xff] %v699
        %753 = vst [vmem:[%s739] ss:$2 sm:$0xff] %v701
        %754 = vst [vmem:[%s741] ss:$2 sm:$0xff] %v703
        %v755 = vld.sshfl [vmem:[#allocation1] sm:$0xff pattern:$0x75316420]
        %v756 = vld.sshfl [vmem:[#allocation1 + $0x8] sm:$0xff pattern:$0x75316420]
        %v757 = vld.sshfl [vmem:[#allocation1 + $0x10] sm:$0xff pattern:$0x75316420]
        %v758 = vld.sshfl [vmem:[#allocation1 + $0x18] sm:$0xff pattern:$0x75316420]
        %v759 = vld.sshfl [vmem:[#allocation1 + $0x20] sm:$0xff pattern:$0x75316420]
        %v760 = vld.sshfl [vmem:[#allocation1 + $0x28] sm:$0xff pattern:$0x75316420]
        %v761 = vld.sshfl [vmem:[#allocation1 + $0x30] sm:$0xff pattern:$0x75316420]
        %v762 = vld.sshfl [vmem:[#allocation1 + $0x38] sm:$0xff pattern:$0x75316420]
        %763 = vst [vmem:[#allocation1] ss:$2 sm:$0xff] %v705
        %764 = vst [vmem:[%s737] ss:$2 sm:$0xff] %v707
        %765 = vst [vmem:[%s739] ss:$2 sm:$0xff] %v709
        %766 = vst [vmem:[%s741] ss:$2 sm:$0xff] %v711
        %v767 = vld.sshfl [vmem:[#allocation1] sm:$0xff pattern:$0x75316420]
        %v768 = vld.sshfl [vmem:[#allocation1 + $0x8] sm:$0xff pattern:$0x75316420]
        %v769 = vld.sshfl [vmem:[#allocation1 + $0x10] sm:$0xff pattern:$0x75316420]
        %v770 = vld.sshfl [vmem:[#allocation1 + $0x18] sm:$0xff pattern:$0x75316420]
        %v771 = vld.sshfl [vmem:[#allocation1 + $0x20] sm:$0xff pattern:$0x75316420]
        %v772 = vld.sshfl [vmem:[#allocation1 + $0x28] sm:$0xff pattern:$0x75316420]
        %v773 = vld.sshfl [vmem:[#allocation1 + $0x30] sm:$0xff pattern:$0x75316420]
        %v774 = vld.sshfl [vmem:[#allocation1 + $0x38] sm:$0xff pattern:$0x75316420]
        %775 = vst [vmem:[#allocation1] ss:$2 sm:$0xff] %v713
        %776 = vst [vmem:[%s737] ss:$2 sm:$0xff] %v715
        %777 = vst [vmem:[%s739] ss:$2 sm:$0xff] %v717
        %778 = vst [vmem:[%s741] ss:$2 sm:$0xff] %v719
        %v779 = vld.sshfl [vmem:[#allocation1] sm:$0xff pattern:$0x75316420]
        %v780 = vld.sshfl [vmem:[#allocation1 + $0x8] sm:$0xff pattern:$0x75316420]
        %v781 = vld.sshfl [vmem:[#allocation1 + $0x10] sm:$0xff pattern:$0x75316420]
        %v782 = vld.sshfl [vmem:[#allocation1 + $0x18] sm:$0xff pattern:$0x75316420]
        %v783 = vld.sshfl [vmem:[#allocation1 + $0x20] sm:$0xff pattern:$0x75316420]
        %v784 = vld.sshfl [vmem:[#allocation1 + $0x28] sm:$0xff pattern:$0x75316420]
        %v785 = vld.sshfl [vmem:[#allocation1 + $0x30] sm:$0xff pattern:$0x75316420]
        %v786 = vld.sshfl [vmem:[#allocation1 + $0x38] sm:$0xff pattern:$0x75316420]
        %v819 = vsel %vm367, %v743, 0.0
        %v820 = vrot.slane %v819, 4
        %v821 = vadd.f32 %v819, %v820
        %v822 = vrot.slane %v821, 2
        %v823 = vadd.f32 %v821, %v822
        %v824 = vrot.slane %v823, 1
        %v825 = vadd.f32 %v823, %v824
        %v826 = vsel %vm367, %v744, 0.0
        %v827 = vrot.slane %v826, 4
        %v828 = vadd.f32 %v826, %v827
        %v829 = vrot.slane %v828, 2
        %v830 = vadd.f32 %v828, %v829
        %v831 = vrot.slane %v830, 1
        %v832 = vadd.f32 %v830, %v831
        %v833 = vsel %vm367, %v745, 0.0
        %v834 = vrot.slane %v833, 4
        %v835 = vadd.f32 %v833, %v834
        %v836 = vrot.slane %v835, 2
        %v837 = vadd.f32 %v835, %v836
        %v838 = vrot.slane %v837, 1
        %v839 = vadd.f32 %v837, %v838
        %v840 = vsel %vm367, %v746, 0.0
        %v841 = vrot.slane %v840, 4
        %v842 = vadd.f32 %v840, %v841
        %v843 = vrot.slane %v842, 2
        %v844 = vadd.f32 %v842, %v843
        %v845 = vrot.slane %v844, 1
        %v846 = vadd.f32 %v844, %v845
        %v847 = vsel %vm367, %v747, 0.0
        %v848 = vrot.slane %v847, 4
        %v849 = vadd.f32 %v847, %v848
        %v850 = vrot.slane %v849, 2
        %v851 = vadd.f32 %v849, %v850
        %v852 = vrot.slane %v851, 1
        %v853 = vadd.f32 %v851, %v852
        %v854 = vsel %vm367, %v748, 0.0
        %v855 = vrot.slane %v854, 4
        %v856 = vadd.f32 %v854, %v855
        %v857 = vrot.slane %v856, 2
        %v858 = vadd.f32 %v856, %v857
        %v859 = vrot.slane %v858, 1
        %v860 = vadd.f32 %v858, %v859
        %v861 = vsel %vm367, %v749, 0.0
        %v862 = vrot.slane %v861, 4
        %v863 = vadd.f32 %v861, %v862
        %v864 = vrot.slane %v863, 2
        %v865 = vadd.f32 %v863, %v864
        %v866 = vrot.slane %v865, 1
        %v867 = vadd.f32 %v865, %v866
        %v868 = vsel %vm367, %v750, 0.0
        %v869 = vrot.slane %v868, 4
        %v870 = vadd.f32 %v868, %v869
        %v871 = vrot.slane %v870, 2
        %v872 = vadd.f32 %v870, %v871
        %v873 = vrot.slane %v872, 1
        %v874 = vadd.f32 %v872, %v873
        %v875 = vsel %vm367, %v755, 0.0
        %v876 = vrot.slane %v875, 4
        %v877 = vadd.f32 %v875, %v876
        %v878 = vrot.slane %v877, 2
        %v879 = vadd.f32 %v877, %v878
        %v880 = vrot.slane %v879, 1
        %v881 = vadd.f32 %v879, %v880
        %v882 = vsel %vm367, %v756, 0.0
        %v883 = vrot.slane %v882, 4
        %v884 = vadd.f32 %v882, %v883
        %v885 = vrot.slane %v884, 2
        %v886 = vadd.f32 %v884, %v885
        %v887 = vrot.slane %v886, 1
        %v888 = vadd.f32 %v886, %v887
        %v889 = vsel %vm367, %v757, 0.0
        %v890 = vrot.slane %v889, 4
        %v891 = vadd.f32 %v889, %v890
        %v892 = vrot.slane %v891, 2
        %v893 = vadd.f32 %v891, %v892
        %v894 = vrot.slane %v893, 1
        %v895 = vadd.f32 %v893, %v894
        %v896 = vsel %vm367, %v758, 0.0
        %v897 = vrot.slane %v896, 4
        %v898 = vadd.f32 %v896, %v897
        %v899 = vrot.slane %v898, 2
        %v900 = vadd.f32 %v898, %v899
        %v901 = vrot.slane %v900, 1
        %v902 = vadd.f32 %v900, %v901
        %v903 = vsel %vm367, %v759, 0.0
        %v904 = vrot.slane %v903, 4
        %v905 = vadd.f32 %v903, %v904
        %v906 = vrot.slane %v905, 2
        %v907 = vadd.f32 %v905, %v906
        %v908 = vrot.slane %v907, 1
        %v909 = vadd.f32 %v907, %v908
        %v910 = vsel %vm367, %v760, 0.0
        %v911 = vrot.slane %v910, 4
        %v912 = vadd.f32 %v910, %v911
        %v913 = vrot.slane %v912, 2
        %v914 = vadd.f32 %v912, %v913
        %v915 = vrot.slane %v914, 1
        %v916 = vadd.f32 %v914, %v915
        %v917 = vsel %vm367, %v761, 0.0
        %v918 = vrot.slane %v917, 4
        %v919 = vadd.f32 %v917, %v918
        %v920 = vrot.slane %v919, 2
        %v921 = vadd.f32 %v919, %v920
        %v922 = vrot.slane %v921, 1
        %v923 = vadd.f32 %v921, %v922
        %v924 = vsel %vm367, %v762, 0.0
        %v925 = vrot.slane %v924, 4
        %v926 = vadd.f32 %v924, %v925
        %v927 = vrot.slane %v926, 2
        %v928 = vadd.f32 %v926, %v927
        %v929 = vrot.slane %v928, 1
        %v930 = vadd.f32 %v928, %v929
        %v931 = vsel %vm367, %v767, 0.0
        %v932 = vrot.slane %v931, 4
        %v933 = vadd.f32 %v931, %v932
        %v934 = vrot.slane %v933, 2
        %v935 = vadd.f32 %v933, %v934
        %v936 = vrot.slane %v935, 1
        %v937 = vadd.f32 %v935, %v936
        %v938 = vsel %vm367, %v768, 0.0
        %v939 = vrot.slane %v938, 4
        %v940 = vadd.f32 %v938, %v939
        %v941 = vrot.slane %v940, 2
        %v942 = vadd.f32 %v940, %v941
        %v943 = vrot.slane %v942, 1
        %v944 = vadd.f32 %v942, %v943
        %v945 = vsel %vm367, %v769, 0.0
        %v946 = vrot.slane %v945, 4
        %v947 = vadd.f32 %v945, %v946
        %v948 = vrot.slane %v947, 2
        %v949 = vadd.f32 %v947, %v948
        %v950 = vrot.slane %v949, 1
        %v951 = vadd.f32 %v949, %v950
        %v952 = vsel %vm367, %v770, 0.0
        %v953 = vrot.slane %v952, 4
        %v954 = vadd.f32 %v952, %v953
        %v955 = vrot.slane %v954, 2
        %v956 = vadd.f32 %v954, %v955
        %v957 = vrot.slane %v956, 1
        %v958 = vadd.f32 %v956, %v957
        %v959 = vsel %vm367, %v771, 0.0
        %v960 = vrot.slane %v959, 4
        %v961 = vadd.f32 %v959, %v960
        %v962 = vrot.slane %v961, 2
        %v963 = vadd.f32 %v961, %v962
        %v964 = vrot.slane %v963, 1
        %v965 = vadd.f32 %v963, %v964
        %v966 = vsel %vm367, %v772, 0.0
        %v967 = vrot.slane %v966, 4
        %v968 = vadd.f32 %v966, %v967
        %v969 = vrot.slane %v968, 2
        %v970 = vadd.f32 %v968, %v969
        %v971 = vrot.slane %v970, 1
        %v972 = vadd.f32 %v970, %v971
        %v973 = vsel %vm367, %v773, 0.0
        %v974 = vrot.slane %v973, 4
        %v975 = vadd.f32 %v973, %v974
        %v976 = vrot.slane %v975, 2
        %v977 = vadd.f32 %v975, %v976
        %v978 = vrot.slane %v977, 1
        %v979 = vadd.f32 %v977, %v978
        %v980 = vsel %vm367, %v774, 0.0
        %v981 = vrot.slane %v980, 4
        %v982 = vadd.f32 %v980, %v981
        %v983 = vrot.slane %v982, 2
        %v984 = vadd.f32 %v982, %v983
        %v985 = vrot.slane %v984, 1
        %v986 = vadd.f32 %v984, %v985
        %v987 = vsel %vm367, %v779, 0.0
        %v988 = vrot.slane %v987, 4
        %v989 = vadd.f32 %v987, %v988
        %v990 = vrot.slane %v989, 2
        %v991 = vadd.f32 %v989, %v990
        %v992 = vrot.slane %v991, 1
        %v993 = vadd.f32 %v991, %v992
        %v994 = vsel %vm367, %v780, 0.0
        %v995 = vrot.slane %v994, 4
        %v996 = vadd.f32 %v994, %v995
        %v997 = vrot.slane %v996, 2
        %v998 = vadd.f32 %v996, %v997
        %v999 = vrot.slane %v998, 1
        %v1000 = vadd.f32 %v998, %v999
        %v1001 = vsel %vm367, %v781, 0.0
        %v1002 = vrot.slane %v1001, 4
        %v1003 = vadd.f32 %v1001, %v1002
        %v1004 = vrot.slane %v1003, 2
        %v1005 = vadd.f32 %v1003, %v1004
        %v1006 = vrot.slane %v1005, 1
        %v1007 = vadd.f32 %v1005, %v1006
        %v1008 = vsel %vm367, %v782, 0.0
        %v1009 = vrot.slane %v1008, 4
        %v1010 = vadd.f32 %v1008, %v1009
        %v1011 = vrot.slane %v1010, 2
        %v1012 = vadd.f32 %v1010, %v1011
        %v1013 = vrot.slane %v1012, 1
        %v1014 = vadd.f32 %v1012, %v1013
        %v1015 = vsel %vm367, %v783, 0.0
        %v1016 = vrot.slane %v1015, 4
        %v1017 = vadd.f32 %v1015, %v1016
        %v1018 = vrot.slane %v1017, 2
        %v1019 = vadd.f32 %v1017, %v1018
        %v1020 = vrot.slane %v1019, 1
        %v1021 = vadd.f32 %v1019, %v1020
        %v1022 = vsel %vm367, %v784, 0.0
        %v1023 = vrot.slane %v1022, 4
        %v1024 = vadd.f32 %v1022, %v1023
        %v1025 = vrot.slane %v1024, 2
        %v1026 = vadd.f32 %v1024, %v1025
        %v1027 = vrot.slane %v1026, 1
        %v1028 = vadd.f32 %v1026, %v1027
        %v1029 = vsel %vm367, %v785, 0.0
        %v1030 = vrot.slane %v1029, 4
        %v1031 = vadd.f32 %v1029, %v1030
        %v1032 = vrot.slane %v1031, 2
        %v1033 = vadd.f32 %v1031, %v1032
        %v1034 = vrot.slane %v1033, 1
        %v1035 = vadd.f32 %v1033, %v1034
        %v1036 = vsel %vm367, %v786, 0.0
        %v1037 = vrot.slane %v1036, 4
        %v1038 = vadd.f32 %v1036, %v1037
        %v1039 = vrot.slane %v1038, 2
        %v1040 = vadd.f32 %v1038, %v1039
        %v1041 = vrot.slane %v1040, 1
        %v1042 = vadd.f32 %v1040, %v1041
        %v1043 = vlog2.pop %v825
        %v1044 = vmul.f32 %v1043, 0.6931472
        %v1045 = vlog2.pop %v832
        %v1046 = vmul.f32 %v1045, 0.6931472
        %v1047 = vlog2.pop %v839
        %v1048 = vmul.f32 %v1047, 0.6931472
        %v1049 = vlog2.pop %v846
        %v1050 = vmul.f32 %v1049, 0.6931472
        %v1051 = vlog2.pop %v853
        %v1052 = vmul.f32 %v1051, 0.6931472
        %v1053 = vlog2.pop %v860
        %v1054 = vmul.f32 %v1053, 0.6931472
        %v1055 = vlog2.pop %v867
        %v1056 = vmul.f32 %v1055, 0.6931472
        %v1057 = vlog2.pop %v874
        %v1058 = vmul.f32 %v1057, 0.6931472
        %v1059 = vlog2.pop %v881
        %v1060 = vmul.f32 %v1059, 0.6931472
        %v1061 = vlog2.pop %v888
        %v1062 = vmul.f32 %v1061, 0.6931472
        %v1063 = vlog2.pop %v895
        %v1064 = vmul.f32 %v1063, 0.6931472
        %v1065 = vlog2.pop %v902
        %v1066 = vmul.f32 %v1065, 0.6931472
        %v1067 = vlog2.pop %v909
        %v1068 = vmul.f32 %v1067, 0.6931472
        %v1069 = vlog2.pop %v916
        %v1070 = vmul.f32 %v1069, 0.6931472
        %v1071 = vlog2.pop %v923
        %v1072 = vmul.f32 %v1071, 0.6931472
        %v1073 = vlog2.pop %v930
        %v1074 = vmul.f32 %v1073, 0.6931472
        %v1075 = vlog2.pop %v937
        %v1076 = vmul.f32 %v1075, 0.6931472
        %v1077 = vlog2.pop %v944
        %v1078 = vmul.f32 %v1077, 0.6931472
        %v1079 = vlog2.pop %v951
        %v1080 = vmul.f32 %v1079, 0.6931472
        %v1081 = vlog2.pop %v958
        %v1082 = vmul.f32 %v1081, 0.6931472
        %v1083 = vlog2.pop %v965
        %v1084 = vmul.f32 %v1083, 0.6931472
        %v1085 = vlog2.pop %v972
        %v1086 = vmul.f32 %v1085, 0.6931472
        %v1087 = vlog2.pop %v979
        %v1088 = vmul.f32 %v1087, 0.6931472
        %v1089 = vlog2.pop %v986
        %v1090 = vmul.f32 %v1089, 0.6931472
        %v1091 = vlog2.pop %v993
        %v1092 = vmul.f32 %v1091, 0.6931472
        %v1093 = vlog2.pop %v1000
        %v1094 = vmul.f32 %v1093, 0.6931472
        %v1095 = vlog2.pop %v1007
        %v1096 = vmul.f32 %v1095, 0.6931472
        %v1097 = vlog2.pop %v1014
        %v1098 = vmul.f32 %v1097, 0.6931472
        %v1099 = vlog2.pop %v1021
        %v1100 = vmul.f32 %v1099, 0.6931472
        %v1101 = vlog2.pop %v1028
        %v1102 = vmul.f32 %v1101, 0.6931472
        %v1103 = vlog2.pop %v1035
        %v1104 = vmul.f32 %v1103, 0.6931472
        %v1105 = vlog2.pop %v1042
        %v1106 = vmul.f32 %v1105, 0.6931472
        %v1107 = vadd.f32 %v374, %v1044
        %v1108 = vadd.f32 %v381, %v1046
        %v1109 = vadd.f32 %v388, %v1048
        %v1110 = vadd.f32 %v395, %v1050
        %v1111 = vadd.f32 %v402, %v1052
        %v1112 = vadd.f32 %v409, %v1054
        %v1113 = vadd.f32 %v416, %v1056
        %v1114 = vadd.f32 %v423, %v1058
        %v1115 = vadd.f32 %v430, %v1060
        %v1116 = vadd.f32 %v437, %v1062
        %v1117 = vadd.f32 %v444, %v1064
        %v1118 = vadd.f32 %v451, %v1066
        %v1119 = vadd.f32 %v458, %v1068
        %v1120 = vadd.f32 %v465, %v1070
        %v1121 = vadd.f32 %v472, %v1072
        %v1122 = vadd.f32 %v479, %v1074
        %v1123 = vadd.f32 %v486, %v1076
        %v1124 = vadd.f32 %v493, %v1078
        %v1125 = vadd.f32 %v500, %v1080
        %v1126 = vadd.f32 %v507, %v1082
        %v1127 = vadd.f32 %v514, %v1084
        %v1128 = vadd.f32 %v521, %v1086
        %v1129 = vadd.f32 %v528, %v1088
        %v1130 = vadd.f32 %v535, %v1090
        %v1131 = vadd.f32 %v542, %v1092
        %v1132 = vadd.f32 %v549, %v1094
        %v1133 = vadd.f32 %v556, %v1096
        %v1134 = vadd.f32 %v563, %v1098
        %v1135 = vadd.f32 %v570, %v1100
        %v1136 = vadd.f32 %v577, %v1102
        %v1137 = vadd.f32 %v584, %v1104
        %v1138 = vadd.f32 %v591, %v1106
        %vm1139 = vcmp.eq.s32.totalorder %v264, 0
        %vm1140 = vcmp.eq.s32.totalorder %v265, 0
        %vm1141 = vcmp.eq.s32.totalorder %v266, 0
        %vm1142 = vcmp.eq.s32.totalorder %v267, 0
        %v1143 = vrot.slane %v248, 3
        %v1144 = vrot.slane %v249, 6
        %v1145 = vrot.slane %v249, 1
        %v1146 = vrot.slane %v250, 4
        %v1147 = vrot.slane %v250, 7
        %v1148 = vrot.slane %v251, 2
        %v1149 = vrot.slane %v251, 5
        %v1150 = vrot.slane %v252, 3
        %v1151 = vrot.slane %v253, 6
        %v1152 = vrot.slane %v253, 1
        %v1153 = vrot.slane %v254, 4
        %v1154 = vrot.slane %v254, 7
        %v1155 = vrot.slane %v255, 2
        %v1156 = vrot.slane %v255, 5
        %v1157 = vrot.slane %v256, 3
        %v1158 = vrot.slane %v257, 6
        %v1159 = vrot.slane %v257, 1
        %v1160 = vrot.slane %v258, 4
        %v1161 = vrot.slane %v258, 7
        %v1162 = vrot.slane %v259, 2
        %v1163 = vrot.slane %v259, 5
        %v1164 = vrot.slane %v260, 3
        %v1165 = vrot.slane %v261, 6
        %v1166 = vrot.slane %v261, 1
        %v1167 = vrot.slane %v262, 4
        %v1168 = vrot.slane %v262, 7
        %v1169 = vrot.slane %v263, 2
        %v1170 = vrot.slane %v263, 5
        %vm1171 = vcmask 1040384
        %v1172 = vsel %vm1171, %v248, %v1143
        %vm1173 = vcmask 1042434
        %v1174 = vsel %vm1173, %v1144, %v1145
        %vm1175 = vcmask 1041408
        %v1176 = vsel %vm1175, %v1172, %v1174
        %vm1177 = vcmask 1044484
        %v1178 = vsel %vm1177, %v1146, %v1147
        %vm1179 = vcmask 1046534
        %v1180 = vsel %vm1179, %v1148, %v1149
        %vm1181 = vcmask 1045508
        %v1182 = vsel %vm1181, %v1178, %v1180
        %v1183 = vsel %vm367, %v1176, %v1182
        %v1184 = vsel %vm1171, %v252, %v1150
        %v1185 = vsel %vm1173, %v1151, %v1152
        %v1186 = vsel %vm1175, %v1184, %v1185
        %v1187 = vsel %vm1177, %v1153, %v1154
        %v1188 = vsel %vm1179, %v1155, %v1156
        %v1189 = vsel %vm1181, %v1187, %v1188
        %v1190 = vsel %vm367, %v1186, %v1189
        %v1191 = vsel %vm1171, %v256, %v1157
        %v1192 = vsel %vm1173, %v1158, %v1159
        %v1193 = vsel %vm1175, %v1191, %v1192
        %v1194 = vsel %vm1177, %v1160, %v1161
        %v1195 = vsel %vm1179, %v1162, %v1163
        %v1196 = vsel %vm1181, %v1194, %v1195
        %v1197 = vsel %vm367, %v1193, %v1196
        %v1198 = vsel %vm1171, %v260, %v1164
        %v1199 = vsel %vm1173, %v1165, %v1166
        %v1200 = vsel %vm1175, %v1198, %v1199
        %v1201 = vsel %vm1177, %v1167, %v1168
        %v1202 = vsel %vm1179, %v1169, %v1170
        %v1203 = vsel %vm1181, %v1201, %v1202
        %v1204 = vsel %vm367, %v1200, %v1203
        %v1209 = vsel %vm1139, %v1183, 0.0
        %v1210 = vsel %vm1140, %v1190, 0.0
        %v1211 = vsel %vm1141, %v1197, 0.0
        %v1212 = vsel %vm1142, %v1204, 0.0
        %vm1213 = vcmp.eq.s32.totalorder %v264, 1
        %vm1214 = vcmp.eq.s32.totalorder %v265, 1
        %vm1215 = vcmp.eq.s32.totalorder %v266, 1
        %vm1216 = vcmp.eq.s32.totalorder %v267, 1
        %1217 = vst [vmem:[#allocation1] sm:$0xff] %v248
        %1218 = vst [vmem:[#allocation1 + $0x8] sm:$0xff] %v249
        %1219 = vst [vmem:[#allocation1 + $0x10] sm:$0xff] %v250
        %1220 = vst [vmem:[#allocation1 + $0x18] sm:$0xff] %v251
        %1221 = vst [vmem:[#allocation1 + $0x20] sm:$0xff] %v252
        %1222 = vst [vmem:[#allocation1 + $0x28] sm:$0xff] %v253
        %1223 = vst [vmem:[#allocation1 + $0x30] sm:$0xff] %v254
        %1224 = vst [vmem:[#allocation1 + $0x38] sm:$0xff] %v255
        %s1225 = scalar_lea.vmem [#allocation1], 1
        %v1226 = vld [vmem:[%s1225] ss:$4 sm:$0xff]
        %s1227 = scalar_lea.vmem [#allocation1], 33
        %v1228 = vld [vmem:[%s1227] ss:$4 sm:$0xff]
        %1229 = vst [vmem:[#allocation1] sm:$0xff] %v256
        %1230 = vst [vmem:[#allocation1 + $0x8] sm:$0xff] %v257
        %1231 = vst [vmem:[#allocation1 + $0x10] sm:$0xff] %v258
        %1232 = vst [vmem:[#allocation1 + $0x18] sm:$0xff] %v259
        %1233 = vst [vmem:[#allocation1 + $0x20] sm:$0xff] %v260
        %1234 = vst [vmem:[#allocation1 + $0x28] sm:$0xff] %v261
        %1235 = vst [vmem:[#allocation1 + $0x30] sm:$0xff] %v262
        %1236 = vst [vmem:[#allocation1 + $0x38] sm:$0xff] %v263
        %v1237 = vld [vmem:[%s1225] ss:$4 sm:$0xff]
        %v1238 = vld [vmem:[%s1227] ss:$4 sm:$0xff]
        %v1243 = vsel %vm1213, %v1226, 0.0
        %v1244 = vsel %vm1214, %v1228, 0.0
        %v1245 = vsel %vm1215, %v1237, 0.0
        %v1246 = vsel %vm1216, %v1238, 0.0
        %v1247 = vadd.f32 %v1209, %v1243
        %v1248 = vadd.f32 %v1210, %v1244
        %v1249 = vadd.f32 %v1211, %v1245
        %v1250 = vadd.f32 %v1212, %v1246
        %vm1251 = vcmp.eq.s32.totalorder %v264, 2
        %vm1252 = vcmp.eq.s32.totalorder %v265, 2
        %vm1253 = vcmp.eq.s32.totalorder %v266, 2
        %vm1254 = vcmp.eq.s32.totalorder %v267, 2
        %1255 = vst [vmem:[#allocation1] sm:$0xff] %v248
        %1256 = vst [vmem:[#allocation1 + $0x8] sm:$0xff] %v249
        %1257 = vst [vmem:[#allocation1 + $0x10] sm:$0xff] %v250
        %1258 = vst [vmem:[#allocation1 + $0x18] sm:$0xff] %v251
        %1259 = vst [vmem:[#allocation1 + $0x20] sm:$0xff] %v252
        %1260 = vst [vmem:[#allocation1 + $0x28] sm:$0xff] %v253
        %1261 = vst [vmem:[#allocation1 + $0x30] sm:$0xff] %v254
        %1262 = vst [vmem:[#allocation1 + $0x38] sm:$0xff] %v255
        %s1263 = scalar_lea.vmem [#allocation1], 2
        %v1264 = vld [vmem:[%s1263] ss:$4 sm:$0xff]
        %s1265 = scalar_lea.vmem [#allocation1], 34
        %v1266 = vld [vmem:[%s1265] ss:$4 sm:$0xff]
        %1267 = vst [vmem:[#allocation1] sm:$0xff] %v256
        %1268 = vst [vmem:[#allocation1 + $0x8] sm:$0xff] %v257
        %1269 = vst [vmem:[#allocation1 + $0x10] sm:$0xff] %v258
        %1270 = vst [vmem:[#allocation1 + $0x18] sm:$0xff] %v259
        %1271 = vst [vmem:[#allocation1 + $0x20] sm:$0xff] %v260
        %1272 = vst [vmem:[#allocation1 + $0x28] sm:$0xff] %v261
        %1273 = vst [vmem:[#allocation1 + $0x30] sm:$0xff] %v262
        %1274 = vst [vmem:[#allocation1 + $0x38] sm:$0xff] %v263
        %v1275 = vld [vmem:[%s1263] ss:$4 sm:$0xff]
        %v1276 = vld [vmem:[%s1265] ss:$4 sm:$0xff]
        %v1281 = vsel %vm1251, %v1264, 0.0
        %v1282 = vsel %vm1252, %v1266, 0.0
        %v1283 = vsel %vm1253, %v1275, 0.0
        %v1284 = vsel %vm1254, %v1276, 0.0
        %v1285 = vadd.f32 %v1247, %v1281
        %v1286 = vadd.f32 %v1248, %v1282
        %v1287 = vadd.f32 %v1249, %v1283
        %v1288 = vadd.f32 %v1250, %v1284
        %vm1289 = vcmp.eq.s32.totalorder %v264, 3
        %vm1290 = vcmp.eq.s32.totalorder %v265, 3
        %vm1291 = vcmp.eq.s32.totalorder %v266, 3
        %vm1292 = vcmp.eq.s32.totalorder %v267, 3
        %1293 = vst [vmem:[#allocation1] sm:$0xff] %v248
        %1294 = vst [vmem:[#allocation1 + $0x8] sm:$0xff] %v249
        %1295 = vst [vmem:[#allocation1 + $0x10] sm:$0xff] %v250
        %1296 = vst [vmem:[#allocation1 + $0x18] sm:$0xff] %v251
        %1297 = vst [vmem:[#allocation1 + $0x20] sm:$0xff] %v252
        %1298 = vst [vmem:[#allocation1 + $0x28] sm:$0xff] %v253
        %1299 = vst [vmem:[#allocation1 + $0x30] sm:$0xff] %v254
        %1300 = vst [vmem:[#allocation1 + $0x38] sm:$0xff] %v255
        %s1301 = scalar_lea.vmem [#allocation1], 3
        %v1302 = vld [vmem:[%s1301] ss:$4 sm:$0xff]
        %s1303 = scalar_lea.vmem [#allocation1], 35
        %v1304 = vld [vmem:[%s1303] ss:$4 sm:$0xff]
        %1305 = vst [vmem:[#allocation1] sm:$0xff] %v256
        %1306 = vst [vmem:[#allocation1 + $0x8] sm:$0xff] %v257
        %1307 = vst [vmem:[#allocation1 + $0x10] sm:$0xff] %v258
        %1308 = vst [vmem:[#allocation1 + $0x18] sm:$0xff] %v259
        %1309 = vst [vmem:[#allocation1 + $0x20] sm:$0xff] %v260
        %1310 = vst [vmem:[#allocation1 + $0x28] sm:$0xff] %v261
        %1311 = vst [vmem:[#allocation1 + $0x30] sm:$0xff] %v262
        %1312 = vst [vmem:[#allocation1 + $0x38] sm:$0xff] %v263
        %v1313 = vld [vmem:[%s1301] ss:$4 sm:$0xff]
        %v1314 = vld [vmem:[%s1303] ss:$4 sm:$0xff]
        %v1319 = vsel %vm1289, %v1302, 0.0
        %v1320 = vsel %vm1290, %v1304, 0.0
        %v1321 = vsel %vm1291, %v1313, 0.0
        %v1322 = vsel %vm1292, %v1314, 0.0
        %v1323 = vadd.f32 %v1285, %v1319
        %v1324 = vadd.f32 %v1286, %v1320
        %v1325 = vadd.f32 %v1287, %v1321
        %v1326 = vadd.f32 %v1288, %v1322
        %v1331 = vperm.slane %v1323, 0
        %v1332 = vperm.slane %v1323, 1
        %v1333 = vperm.slane %v1323, 2
        %v1334 = vperm.slane %v1323, 3
        %v1335 = vperm.slane %v1323, 4
        %v1336 = vperm.slane %v1323, 5
        %v1337 = vperm.slane %v1323, 6
        %v1338 = vperm.slane %v1323, 7
        %v1339 = vperm.slane %v1324, 0
        %v1340 = vperm.slane %v1324, 1
        %v1341 = vperm.slane %v1324, 2
        %v1342 = vperm.slane %v1324, 3
        %v1343 = vperm.slane %v1324, 4
        %v1344 = vperm.slane %v1324, 5
        %v1345 = vperm.slane %v1324, 6
        %v1346 = vperm.slane %v1324, 7
        %v1347 = vperm.slane %v1325, 0
        %v1348 = vperm.slane %v1325, 1
        %v1349 = vperm.slane %v1325, 2
        %v1350 = vperm.slane %v1325, 3
        %v1351 = vperm.slane %v1325, 4
        %v1352 = vperm.slane %v1325, 5
        %v1353 = vperm.slane %v1325, 6
        %v1354 = vperm.slane %v1325, 7
        %v1355 = vperm.slane %v1326, 0
        %v1356 = vperm.slane %v1326, 1
        %v1357 = vperm.slane %v1326, 2
        %v1358 = vperm.slane %v1326, 3
        %v1359 = vperm.slane %v1326, 4
        %v1360 = vperm.slane %v1326, 5
        %v1361 = vperm.slane %v1326, 6
        %v1362 = vperm.slane %v1326, 7
        %v1395 = vsub.f32 %v1107, %v1331
        %v1396 = vsub.f32 %v1108, %v1332
        %v1397 = vsub.f32 %v1109, %v1333
        %v1398 = vsub.f32 %v1110, %v1334
        %v1399 = vsub.f32 %v1111, %v1335
        %v1400 = vsub.f32 %v1112, %v1336
        %v1401 = vsub.f32 %v1113, %v1337
        %v1402 = vsub.f32 %v1114, %v1338
        %v1403 = vsub.f32 %v1115, %v1339
        %v1404 = vsub.f32 %v1116, %v1340
        %v1405 = vsub.f32 %v1117, %v1341
        %v1406 = vsub.f32 %v1118, %v1342
        %v1407 = vsub.f32 %v1119, %v1343
        %v1408 = vsub.f32 %v1120, %v1344
        %v1409 = vsub.f32 %v1121, %v1345
        %v1410 = vsub.f32 %v1122, %v1346
        %v1411 = vsub.f32 %v1123, %v1347
        %v1412 = vsub.f32 %v1124, %v1348
        %v1413 = vsub.f32 %v1125, %v1349
        %v1414 = vsub.f32 %v1126, %v1350
        %v1415 = vsub.f32 %v1127, %v1351
        %v1416 = vsub.f32 %v1128, %v1352
        %v1417 = vsub.f32 %v1129, %v1353
        %v1418 = vsub.f32 %v1130, %v1354
        %v1419 = vsub.f32 %v1131, %v1355
        %v1420 = vsub.f32 %v1132, %v1356
        %v1421 = vsub.f32 %v1133, %v1357
        %v1422 = vsub.f32 %v1134, %v1358
        %v1423 = vsub.f32 %v1135, %v1359
        %v1424 = vsub.f32 %v1136, %v1360
        %v1425 = vsub.f32 %v1137, %v1361
        %v1426 = vsub.f32 %v1138, %v1362
        %v1427 = vld [vmem:[%s235] sm:$0xff]
        %v1428 = vld [vmem:[%s235 + $0x8] sm:$0xff]
        %v1429 = vld [vmem:[%s235 + $0x10] sm:$0xff]
        %v1430 = vld [vmem:[%s235 + $0x18] sm:$0xff]
        %v1463 = vrot.slane %v1396, 7
        %v1464 = vrot.slane %v1397, 6
        %v1465 = vrot.slane %v1398, 5
        %v1466 = vrot.slane %v1399, 4
        %v1467 = vrot.slane %v1400, 3
        %v1468 = vrot.slane %v1401, 2
        %v1469 = vrot.slane %v1402, 1
        %v1470 = vrot.slane %v1404, 7
        %v1471 = vrot.slane %v1405, 6
        %v1472 = vrot.slane %v1406, 5
        %v1473 = vrot.slane %v1407, 4
        %v1474 = vrot.slane %v1408, 3
        %v1475 = vrot.slane %v1409, 2
        %v1476 = vrot.slane %v1410, 1
        %v1477 = vrot.slane %v1412, 7
        %v1478 = vrot.slane %v1413, 6
        %v1479 = vrot.slane %v1414, 5
        %v1480 = vrot.slane %v1415, 4
        %v1481 = vrot.slane %v1416, 3
        %v1482 = vrot.slane %v1417, 2
        %v1483 = vrot.slane %v1418, 1
        %v1484 = vrot.slane %v1420, 7
        %v1485 = vrot.slane %v1421, 6
        %v1486 = vrot.slane %v1422, 5
        %v1487 = vrot.slane %v1423, 4
        %v1488 = vrot.slane %v1424, 3
        %v1489 = vrot.slane %v1425, 2
        %v1490 = vrot.slane %v1426, 1
        %v1491 = vsel %vm1171, %v1395, %v1463
        %v1492 = vsel %vm1173, %v1464, %v1465
        %v1493 = vsel %vm1175, %v1491, %v1492
        %v1494 = vsel %vm1177, %v1466, %v1467
        %v1495 = vsel %vm1179, %v1468, %v1469
        %v1496 = vsel %vm1181, %v1494, %v1495
        %v1497 = vsel %vm367, %v1493, %v1496
        %v1498 = vsel %vm1171, %v1403, %v1470
        %v1499 = vsel %vm1173, %v1471, %v1472
        %v1500 = vsel %vm1175, %v1498, %v1499
        %v1501 = vsel %vm1177, %v1473, %v1474
        %v1502 = vsel %vm1179, %v1475, %v1476
        %v1503 = vsel %vm1181, %v1501, %v1502
        %v1504 = vsel %vm367, %v1500, %v1503
        %v1505 = vsel %vm1171, %v1411, %v1477
        %v1506 = vsel %vm1173, %v1478, %v1479
        %v1507 = vsel %vm1175, %v1505, %v1506
        %v1508 = vsel %vm1177, %v1480, %v1481
        %v1509 = vsel %vm1179, %v1482, %v1483
        %v1510 = vsel %vm1181, %v1508, %v1509
        %v1511 = vsel %vm367, %v1507, %v1510
        %v1512 = vsel %vm1171, %v1419, %v1484
        %v1513 = vsel %vm1173, %v1485, %v1486
        %v1514 = vsel %vm1175, %v1512, %v1513
        %v1515 = vsel %vm1177, %v1487, %v1488
        %v1516 = vsel %vm1179, %v1489, %v1490
        %v1517 = vsel %vm1181, %v1515, %v1516
        %v1518 = vsel %vm367, %v1514, %v1517
        %v1523 = vadd.f32 %v1427, %v1497
        %v1524 = vadd.f32 %v1428, %v1504
        %v1525 = vadd.f32 %v1429, %v1511
        %v1526 = vadd.f32 %v1430, %v1518
        %1527 = vst [vmem:[%s235] sm:$0xff] %v1523
        %1528 = vst [vmem:[%s235 + $0x8] sm:$0xff] %v1524
        %1529 = vst [vmem:[%s235 + $0x10] sm:$0xff] %v1525
        %1530 = vst [vmem:[%s235 + $0x18] sm:$0xff] %v1526
        %s1531 = sand.u32 %s111, 1
        %s1532 = scalar_lea.sflag [#allocation4], %s1531
        %s1533 = sand.u32 %s111, 1
        %s1534 = smul.addr %s1533, 32
        %s1535 = scalar_lea.vmem [#allocation7], %s1534
        // Predicated region
        $region41: #{tpu_custom_call.1} parent=27 // pred_check
          %p1536 = pneg %p121
        $region42: #{tpu_custom_call.1} parent=27 // pred_check_branch
          %1538 = sbr.rel (%p1536) target = $region44
        $region43: #{tpu_custom_call.1} parent=27 // pred_region
          %1540 = vsyncadd %s1532, 0
          %s1541 = smul.addr %s28, 32
          %s1542 = smul.addr %s27, 32
          %s1543 = sadd.s32 %s1541, %s1542
          %s1544 = scalar_lea.hbm %s2, %s1543
          %s1546 = sshll.u32 %s1535, 4
          %s1547 = int_to_ptr.vmem [resolvable:$true] %s1546
          %s1548 = sshll.u32 %s1544, 4
          %s1549 = int_to_ptr.hbm [resolvable:$true] %s1548
          %1551 = dma.vmem_to_hbm [thread:$0]  %s1547, 512, %s1549, %s1532
        $region44: #{tpu_custom_call.1} parent=27 // pred_fallthru
          _
      $region28: #{tpu_custom_call.1} parent=5 // pred_fallthru
        _
      %p1552 = scmp.le.s32.totalorder 2, %s17
      // Predicated region
      $region45: #{tpu_custom_call.1} parent=5 // pred_check
        %p1553 = pneg %p1552
      $region46: #{tpu_custom_call.1} parent=5 // pred_check_branch
        %1555 = sbr.rel (%p1553) target = $region48
      $region47: #{tpu_custom_call.1} parent=5 // pred_region
        %s1556 = ssub.s32 %s17, 2
        // Predicated region
        $region49: #{tpu_custom_call.1} parent=47 // pred_check
          %p1557 = pneg %p127
        $region50: #{tpu_custom_call.1} parent=47 // pred_check_branch
          %1559 = sbr.rel (%p1557) target = $region52
        $region51: #{tpu_custom_call.1} parent=47 // pred_region
          %s1560 = sand.u32 %s112, 1
          %s1561 = scalar_lea.sflag [#allocation4], %s1560
          %s1562 = sand.u32 %s112, 1
          %s1563 = smul.addr %s1562, 32
          %s1564 = scalar_lea.vmem [#allocation7], %s1563
          %1566 = dma.done %s1561, 512
        $region52: #{tpu_custom_call.1} parent=47 // pred_fallthru
          _
      $region48: #{tpu_custom_call.1} parent=5 // pred_fallthru
        _
    $region6: #{tpu_custom_call.1} parent=1 // loop_footer
      %s21 = sadd.s32 1, %s17
    $region7: #{tpu_custom_call.1} parent=1 // loop_footer_branch
      %16 = sbr.rel target = $region3
    $region8: #{tpu_custom_call.1} parent=1 // loop_exit
      _
    %1567 = vsyncpa [#allocation3], 1
    %s1568 = scalar_lea.sflag [#allocation3], 1
    %1569 = vsyncpa %s1568, 1
    %1570 = vsyncpa [#allocation6], 1
    %s1571 = scalar_lea.sflag [#allocation6], 1
    %1572 = vsyncpa %s1571, 1
    %1573 = vsyncpa [#allocation4], 1
    %s1574 = scalar_lea.sflag [#allocation4], 1
    %1575 = vsyncpa %s1574, 1

</llo_original>
